<compile_context>
chip_gen: v7x
topology: tpu7x:2x2x1
jax: 0.10.0
libtpu: 0.0.40
codegen_flags: <defaults>
</compile_context>

<pallas_src>
import math
import functools

import jax
import jax.numpy as jnp
from jax import lax
from jax.experimental import pallas as pl
from jax.experimental.pallas import tpu as pltpu


# MXU operands in bf16 (918/996 TF/s on v6e/v7x); accumulation stays f32.
MATMUL_INPUT_DTYPE = jnp.bfloat16
NEG_INF = -1e9


def _mm(a, b):
    """a @ b on the MXU: bf16 operands, f32 accumulate."""
    return jnp.dot(a.astype(MATMUL_INPUT_DTYPE), b.astype(MATMUL_INPUT_DTYPE),
                   preferred_element_type=jnp.float32)


def _mm_nt(a, b):
    """a @ b.T without materializing the transpose (MXU reads the transposed operand)."""
    return lax.dot_general(
        a.astype(MATMUL_INPUT_DTYPE), b.astype(MATMUL_INPUT_DTYPE),
        dimension_numbers=(((1,), (1,)), ((), ())),
        preferred_element_type=jnp.float32)


# ----------------------------- in-kernel attention core -----------------------------

def _attention_out(q, k, v, mask, wo, n_heads):
    """q: (Sq, D) (1/sqrt(dk) already folded into Wq), k/v: (Sk, D),
    mask: (Mq, Sk) or None, wo: (D, D).
    Returns (Sq, D) f32 == concat(heads) @ Wo, computed as a per-head accumulation
    (no lane-narrow concat; only one head's intermediates are live at a time)."""
    sq, d = q.shape
    dk = d // n_heads

    bias = None
    if mask is not None:
        # masked_fill(mask == 0, -1e9) equivalent, built ONCE per grid step in VMEM.
        bias = jnp.where(mask == 0, NEG_INF, 0.0).astype(jnp.float32)

    out = jnp.zeros((sq, d), jnp.float32)
    for h in range(n_heads):                       # static unroll (n_heads is small)
        lo = h * dk
        qh = q[:, lo:lo + dk]
        kh = k[:, lo:lo + dk]
        vh = v[:, lo:lo + dk]
        s = _mm_nt(qh, kh)                         # (Sq, Sk); scale already folded in
        if bias is not None:
            s = s + bias                           # broadcasts (Mq, Sk) over query rows
        s = s - jnp.max(s, axis=-1, keepdims=True)
        p = jnp.exp(s)
        p = p * pl.reciprocal(jnp.sum(p, axis=-1, keepdims=True), approx=True)
        ctx_h = _mm(p, vh)                         # (Sq, dk)
        out = out + _mm(ctx_h, wo[lo:lo + dk, :])  # lane-dense (Sq, D) accumulation
    return out


# ----------------------------- fused kernels -----------------------------

def _mha_self_kernel(x_ref, mask_ref, wqkv_ref, bqkv_ref, wo_ref, bo_ref, o_ref,
                     *, n_heads, apply_mask):
    # x_ref: (S, D); wqkv_ref: (D, 3D) packed (Wq*scale)|Wk|Wv -> one lane-dense matmul.
    x = x_ref[...]
    d = x.shape[-1]
    qkv = _mm(x, wqkv_ref[...]) + bqkv_ref[...]            # (S, 3D)
    q = qkv[:, 0 * d:1 * d]
    k = qkv[:, 1 * d:2 * d]
    v = qkv[:, 2 * d:3 * d]
    mask = mask_ref[...] if apply_mask else None
    out = _attention_out(q, k, v, mask, wo_ref[...], n_heads)
    o_ref[...] = (out + bo_ref[...]).astype(o_ref.dtype)


def _mha_general_kernel(q_ref, k_ref, v_ref, mask_ref,
                        wq_ref, wk_ref, wv_ref, wo_ref,
                        bq_ref, bk_ref, bv_ref, bo_ref,
                        o_ref, *, n_heads, apply_mask):
    # General (cross-attention) path: distinct q/k/v tensors, still one kernel launch.
    q = _mm(q_ref[...], wq_ref[...]) + bq_ref[...]         # scale folded into wq/bq
    k = _mm(k_ref[...], wk_ref[...]) + bk_ref[...]
    v = _mm(v_ref[...], wv_ref[...]) + bv_ref[...]
    mask = mask_ref[...] if apply_mask else None
    out = _attention_out(q, k, v, mask, wo_ref[...], n_heads)
    o_ref[...] = (out + bo_ref[...]).astype(o_ref.dtype)


# ----------------------------- wrappers -----------------------------

def _normalize_mask(mask, B, Sq, Sk):
    """Return (mask_arr, apply_mask). mask_arr is the RAW mask, shape (B, Mq, Sk) with
    Mq in {1, Sq} -- no O(Sq*Sk) additive bias is built in HBM (rank-1 in Sq)."""
    if mask is None:
        return jnp.ones((1, 1, Sk), jnp.float32), False
    m = jnp.asarray(mask).astype(jnp.float32)
    if m.ndim == 2:                       # (B, Sk) key-padding mask
        m = m[:, None, :]
    m = jnp.broadcast_to(m, (B, m.shape[1], Sk))
    return m, True


def multi_head_attention(query, key, value, mask, params):
    """Fused Pallas forward of MultiHeadedAttention. query/key/value: [B, S, D]."""
    B, Sq, D = query.shape
    Sk = key.shape[1]
    H = params["n_heads"]

    mask_arr, apply_mask = _normalize_mask(mask, B, Sq, Sk)
    Mq = mask_arr.shape[1]

    # Leading batch dim squeezed out of kernel refs (kernel sees (S, D) / (Mq, Sk)).
    x_spec = lambda S_: pl.BlockSpec((None, S_, D), lambda b: (b, 0, 0))
    mask_spec = pl.BlockSpec(
        (None, Mq, Sk),
        (lambda b: (b, 0, 0)) if apply_mask else (lambda b: (0, 0, 0)))
    out_spec = pl.BlockSpec((None, Sq, D), lambda b: (b, 0, 0))

    self_attn = (query is key) and (key is value)

    def run(single_buffer_weights):
        def wspec(shape):
            # Weights/biases are grid-invariant: single-buffer them to halve their
            # resident VMEM footprint (important at D~1024 on v7x's 64 MiB VMEM).
            idx = lambda b: (0,) * len(shape)
            if single_buffer_weights:
                return pl.BlockSpec(shape, idx,
                                    pipeline_mode=pl.Buffered(buffer_count=1))
            return pl.BlockSpec(shape, idx)

        cparams = pltpu.CompilerParams(
            dimension_semantics=("parallel",),      # batch grid -> both TCs on v7x
            vmem_limit_bytes=32 * 1024 * 1024,      # raise further for production tiles
        )

        if self_attn:
            flops = B * (2 * Sq * D * 3 * D + 4 * Sq * Sk * D + 2 * Sq * D * D)
            bytes_accessed = 4 * (2 * B * Sq * D + B * Mq * Sk
                                  + D * 3 * D + 3 * D + D * D + D)
            cost = pl.CostEstimate(flops=flops, transcendentals=B * H * Sq * Sk,
                                   bytes_accessed=bytes_accessed)
            return pl.pallas_call(
                functools.partial(_mha_self_kernel, n_heads=H, apply_mask=apply_mask),
                out_shape=jax.ShapeDtypeStruct((B, Sq, D), query.dtype),
                grid=(B,),
                in_specs=[x_spec(Sq), mask_spec,
                          wspec((D, 3 * D)), wspec((1, 3 * D)),
                          wspec((D, D)), wspec((1, D))],
                out_specs=out_spec,
                compiler_params=cparams,
                cost_estimate=cost,
            )(query, mask_arr,
              params["wqkv"], params["bqkv"].reshape(1, 3 * D),
              params["wo"], params["bo"].reshape(1, D))

        flops = B * (2 * Sq * D * D + 4 * Sk * D * D + 4 * Sq * Sk * D + 2 * Sq * D * D)
        bytes_accessed = 4 * (2 * B * Sq * D + 2 * B * Sk * D + B * Mq * Sk
                              + 4 * D * D + 4 * D)
        cost = pl.CostEstimate(flops=flops, transcendentals=B * H * Sq * Sk,
                               bytes_accessed=bytes_accessed)
        return pl.pallas_call(
            functools.partial(_mha_general_kernel, n_heads=H, apply_mask=apply_mask),
            out_shape=jax.ShapeDtypeStruct((B, Sq, D), query.dtype),
            grid=(B,),
            in_specs=[x_spec(Sq), x_spec(Sk), x_spec(Sk), mask_spec,
                      wspec((D, D)), wspec((D, D)), wspec((D, D)), wspec((D, D)),
                      wspec((1, D)), wspec((1, D)), wspec((1, D)), wspec((1, D))],
            out_specs=out_spec,
            compiler_params=cparams,
            cost_estimate=cost,
        )(query, key, value, mask_arr,
          params["wq_s"], params["wk"], params["wv"], params["wo"],
          params["bq_s"].reshape(1, D), params["bk"].reshape(1, D),
          params["bv"].reshape(1, D), params["bo"].reshape(1, D))

    try:
        return run(single_buffer_weights=True)
    except Exception:
        # Fallback for jax/Mosaic versions that reject single-buffered pipeline_mode.
        return run(single_buffer_weights=False)


# ----------------------------- reference & params -----------------------------

def _reference_bias(mask, B, Sq, Sk):
    if mask is None:
        return jnp.zeros((B, 1, 1, Sk), jnp.float32)
    m = jnp.asarray(mask).astype(jnp.float32)
    if m.ndim == 2:
        m = m[:, None, :]
    m = jnp.broadcast_to(m, (B, m.shape[1], Sk))[:, None, :, :]
    return jnp.where(m == 0, NEG_INF, 0.0)


def mha_reference(query, key, value, mask, p):
    """Pure-JAX f32 reference matching the PyTorch module (dropout disabled)."""
    B, Sq, D = query.shape
    Sk = key.shape[1]
    H = p["n_heads"]
    dk = D // H

    def lin(x, w, b):
        return jnp.einsum("bsd,de->bse", x, w) + b

    def split(x, S_):
        return x.reshape(B, S_, H, dk).transpose(0, 2, 1, 3)

    q = split(lin(query, p["wq"], p["bq"]), Sq)
    k = split(lin(key, p["wk"], p["bk"]), Sk)
    v = split(lin(value, p["wv"], p["bv"]), Sk)
    s = jnp.einsum("bhqd,bhkd->bhqk", q, k) / math.sqrt(dk)
    s = s + _reference_bias(mask, B, Sq, Sk)
    p_attn = jax.nn.softmax(s, axis=-1)
    ctx = jnp.einsum("bhqk,bhkd->bhqd", p_attn, v)
    ctx = ctx.transpose(0, 2, 1, 3).reshape(B, Sq, D)
    return jnp.einsum("bsd,de->bse", ctx, p["wo"]) + p["bo"]


def init_mha_params(key, d_model, n_heads):
    keys = jax.random.split(key, 8)

    def w(k, shape):
        return 0.02 * jax.random.normal(k, shape, dtype=jnp.float32)

    p = dict(
        n_heads=n_heads,
        wq=w(keys[0], (d_model, d_model)), bq=w(keys[1], (d_model,)),
        wk=w(keys[2], (d_model, d_model)), bk=w(keys[3], (d_model,)),
        wv=w(keys[4], (d_model, d_model)), bv=w(keys[5], (d_model,)),
        wo=w(keys[6], (d_model, d_model)), bo=w(keys[7], (d_model,)),
    )
    # Fold the 1/sqrt(d_k) attention scale into the Q projection at pack time.
    scale = 1.0 / math.sqrt(d_model // n_heads)
    p["wq_s"] = p["wq"] * scale
    p["bq_s"] = p["bq"] * scale
    # Packed QKV weight/bias for the fused self-attention path (one MXU matmul).
    p["wqkv"] = jnp.concatenate([p["wq_s"], p["wk"], p["wv"]], axis=1)   # (D, 3D)
    p["bqkv"] = jnp.concatenate([p["bq_s"], p["bk"], p["bv"]], axis=0)   # (3D,)
    return p


# --------------------------------- main ---------------------------------

if __name__ == "__main__":
    B, S, D, H = 2, 8, 32, 4

    key = jax.random.PRNGKey(0)
    k_x, k_y, k_p = jax.random.split(key, 3)
    x = jax.random.normal(k_x, (B, S, D), dtype=jnp.float32)   # self-attention input
    y = jax.random.normal(k_y, (B, S, D), dtype=jnp.float32)   # cross-attention memory
    # key-padding mask: batch 1 has its last 2 positions masked out
    mask = jnp.ones((B, 1, S), dtype=jnp.float32).at[1, 0, -2:].set(0.0)

    params = init_mha_params(k_p, D, H)

    out_self = multi_head_attention(x, x, x, mask, params)      # packed-QKV fused path
    out_cross = multi_head_attention(x, y, y, mask, params)     # general fused path
    out_nomask = multi_head_attention(x, x, x, None, params)    # mask=None path
    jax.block_until_ready((out_self, out_cross, out_nomask))

    ref_self = mha_reference(x, x, x, mask, params)
    ref_cross = mha_reference(x, y, y, mask, params)
    ref_nomask = mha_reference(x, x, x, None, params)

    for o, r in ((out_self, ref_self), (out_cross, ref_cross), (out_nomask, ref_nomask)):
        assert o.shape == (B, S, D)
        assert bool(jnp.all(jnp.isfinite(o)))
        assert jnp.allclose(o, r, atol=2e-3, rtol=2e-3), \
            float(jnp.max(jnp.abs(o - r)))
    print("KERNEL_OK")
</pallas_src>

<mosaic_0001>
module attributes {stable_mosaic.version = 11 : i64} {
  func.func @_mha_self_kernel(%arg0: i32, %arg1: memref<1x8x32xf32, #tpu.memory_space<vmem>>, %arg2: memref<1x1x8xf32, #tpu.memory_space<vmem>>, %arg3: memref<32x96xf32, #tpu.memory_space<vmem>>, %arg4: memref<1x96xf32, #tpu.memory_space<vmem>>, %arg5: memref<32x32xf32, #tpu.memory_space<vmem>>, %arg6: memref<1x32xf32, #tpu.memory_space<vmem>>, %arg7: memref<1x8x32xf32, #tpu.memory_space<vmem>>) attributes {dimension_semantics = [#tpu.dimension_semantics<parallel>], iteration_bounds = array<i64: 2>, scalar_prefetch = 0 : i64, scratch_operands = 0 : i64, tpu.core_type = #tpu.core_type<tc>, window_params = [{transform_indices = @transform_0, window_bounds = array<i64: 1, 8, 32>}, {transform_indices = @transform_1, window_bounds = array<i64: 1, 1, 8>}, {pipeline_mode = #tpu.pipeline_mode<synchronous>, transform_indices = @transform_2, window_bounds = array<i64: 32, 96>}, {pipeline_mode = #tpu.pipeline_mode<synchronous>, transform_indices = @transform_3, window_bounds = array<i64: 1, 96>}, {pipeline_mode = #tpu.pipeline_mode<synchronous>, transform_indices = @transform_4, window_bounds = array<i64: 32, 32>}, {pipeline_mode = #tpu.pipeline_mode<synchronous>, transform_indices = @transform_5, window_bounds = array<i64: 1, 32>}, {transform_indices = @transform_6, window_bounds = array<i64: 1, 8, 32>}]} {
    %c0 = arith.constant 0 : index
    %c0_0 = arith.constant 0 : index
    %c0_1 = arith.constant 0 : index
    %0 = vector.load %arg1[%c0, %c0_0, %c0_1] : memref<1x8x32xf32, #tpu.memory_space<vmem>>, vector<1x8x32xf32>
    %1 = vector.shape_cast %0 : vector<1x8x32xf32> to vector<8x32xf32>
    %c0_2 = arith.constant 0 : index
    %c0_3 = arith.constant 0 : index
    %2 = vector.load %arg3[%c0_2, %c0_3] : memref<32x96xf32, #tpu.memory_space<vmem>>, vector<32x96xf32>
    %3 = arith.truncf %1 : vector<8x32xf32> to vector<8x32xbf16>
    %4 = arith.truncf %2 : vector<32x96xf32> to vector<32x96xbf16>
    %cst = arith.constant dense<0.000000e+00> : vector<8x96xf32>
    %5 = tpu.matmul %3, %4, %cst {dimension_numbers = #tpu.dot_dimension_numbers<[1], [0], [0], [1], [0, 0, 1, 1], [], []>} : vector<8x32xbf16>, vector<32x96xbf16>, vector<8x96xf32> -> vector<8x96xf32>
    %c0_4 = arith.constant 0 : index
    %c0_5 = arith.constant 0 : index
    %6 = vector.load %arg4[%c0_4, %c0_5] : memref<1x96xf32, #tpu.memory_space<vmem>>, vector<1x96xf32>
    %7 = vector.broadcast %6 : vector<1x96xf32> to vector<8x96xf32>
    %8 = arith.addf %5, %7 : vector<8x96xf32>
    %9 = vector.extract_strided_slice %8 {offsets = [0, 0], sizes = [8, 32], strides = [1, 1]} : vector<8x96xf32> to vector<8x32xf32>
    %10 = vector.extract_strided_slice %8 {offsets = [0, 32], sizes = [8, 32], strides = [1, 1]} : vector<8x96xf32> to vector<8x32xf32>
    %11 = vector.extract_strided_slice %8 {offsets = [0, 64], sizes = [8, 32], strides = [1, 1]} : vector<8x96xf32> to vector<8x32xf32>
    %c0_6 = arith.constant 0 : index
    %c0_7 = arith.constant 0 : index
    %c0_8 = arith.constant 0 : index
    %12 = vector.load %arg2[%c0_6, %c0_7, %c0_8] : memref<1x1x8xf32, #tpu.memory_space<vmem>>, vector<1x1x8xf32>
    %13 = vector.shape_cast %12 : vector<1x1x8xf32> to vector<1x8xf32>
    %c0_9 = arith.constant 0 : index
    %c0_10 = arith.constant 0 : index
    %14 = vector.load %arg5[%c0_9, %c0_10] : memref<32x32xf32, #tpu.memory_space<vmem>>, vector<32x32xf32>
    %cst_11 = arith.constant 0.000000e+00 : f32
    %15 = vector.broadcast %cst_11 : f32 to vector<1x8xf32>
    %16 = arith.cmpf oeq, %13, %15 : vector<1x8xf32>
    %cst_12 = arith.constant -1.000000e+09 : f32
    %cst_13 = arith.constant 0.000000e+00 : f32
    %17 = vector.broadcast %cst_12 : f32 to vector<1x8xf32>
    %18 = vector.broadcast %cst_13 : f32 to vector<1x8xf32>
    %19 = arith.select %16, %17, %18 : vector<1x8xi1>, vector<1x8xf32>
    %cst_14 = arith.constant 0.000000e+00 : f32
    %20 = vector.broadcast %cst_14 : f32 to vector<8x32xf32>
    %21 = vector.extract_strided_slice %9 {offsets = [0, 0], sizes = [8, 8], strides = [1, 1]} : vector<8x32xf32> to vector<8x8xf32>
    %22 = vector.extract_strided_slice %10 {offsets = [0, 0], sizes = [8, 8], strides = [1, 1]} : vector<8x32xf32> to vector<8x8xf32>
    %23 = vector.extract_strided_slice %11 {offsets = [0, 0], sizes = [8, 8], strides = [1, 1]} : vector<8x32xf32> to vector<8x8xf32>
    %24 = arith.truncf %21 : vector<8x8xf32> to vector<8x8xbf16>
    %25 = arith.truncf %22 : vector<8x8xf32> to vector<8x8xbf16>
    %cst_15 = arith.constant dense<0.000000e+00> : vector<8x8xf32>
    %26 = tpu.matmul %24, %25, %cst_15 {dimension_numbers = #tpu.dot_dimension_numbers<[1], [1], [0], [0], [0, 0, 1, 0], [], []>} : vector<8x8xbf16>, vector<8x8xbf16>, vector<8x8xf32> -> vector<8x8xf32>
    %27 = vector.broadcast %19 : vector<1x8xf32> to vector<8x8xf32>
    %28 = arith.addf %26, %27 : vector<8x8xf32>
    %cst_16 = arith.constant dense<0xFF800000> : vector<8xf32>
    %29 = vector.multi_reduction <maximumf>, %28, %cst_16 [1] : vector<8x8xf32> to vector<8xf32>
    %30 = vector.shape_cast %29 : vector<8xf32> to vector<8x1xf32>
    %31 = vector.broadcast %30 : vector<8x1xf32> to vector<8x8xf32>
    %32 = arith.subf %28, %31 : vector<8x8xf32>
    %33 = math.exp %32 : vector<8x8xf32>
    %cst_17 = arith.constant dense<0.000000e+00> : vector<8xf32>
    %34 = vector.multi_reduction <add>, %33, %cst_17 [1] : vector<8x8xf32> to vector<8xf32>
    %35 = vector.shape_cast %34 : vector<8xf32> to vector<8x1xf32>
    %36 = tpu.reciprocal %35 {approx = true} : vector<8x1xf32> -> vector<8x1xf32>
    %37 = vector.broadcast %36 : vector<8x1xf32> to vector<8x8xf32>
    %38 = arith.mulf %33, %37 : vector<8x8xf32>
    %39 = arith.truncf %38 : vector<8x8xf32> to vector<8x8xbf16>
    %40 = arith.truncf %23 : vector<8x8xf32> to vector<8x8xbf16>
    %cst_18 = arith.constant dense<0.000000e+00> : vector<8x8xf32>
    %41 = tpu.matmul %39, %40, %cst_18 {dimension_numbers = #tpu.dot_dimension_numbers<[1], [0], [0], [1], [0, 0, 1, 1], [], []>} : vector<8x8xbf16>, vector<8x8xbf16>, vector<8x8xf32> -> vector<8x8xf32>
    %42 = vector.extract_strided_slice %14 {offsets = [0, 0], sizes = [8, 32], strides = [1, 1]} : vector<32x32xf32> to vector<8x32xf32>
    %43 = arith.truncf %41 : vector<8x8xf32> to vector<8x8xbf16>
    %44 = arith.truncf %42 : vector<8x32xf32> to vector<8x32xbf16>
    %cst_19 = arith.constant dense<0.000000e+00> : vector<8x32xf32>
    %45 = tpu.matmul %43, %44, %cst_19 {dimension_numbers = #tpu.dot_dimension_numbers<[1], [0], [0], [1], [0, 0, 1, 1], [], []>} : vector<8x8xbf16>, vector<8x32xbf16>, vector<8x32xf32> -> vector<8x32xf32>
    %46 = arith.addf %20, %45 : vector<8x32xf32>
    %47 = vector.extract_strided_slice %9 {offsets = [0, 8], sizes = [8, 8], strides = [1, 1]} : vector<8x32xf32> to vector<8x8xf32>
    %48 = vector.extract_strided_slice %10 {offsets = [0, 8], sizes = [8, 8], strides = [1, 1]} : vector<8x32xf32> to vector<8x8xf32>
    %49 = vector.extract_strided_slice %11 {offsets = [0, 8], sizes = [8, 8], strides = [1, 1]} : vector<8x32xf32> to vector<8x8xf32>
    %50 = arith.truncf %47 : vector<8x8xf32> to vector<8x8xbf16>
    %51 = arith.truncf %48 : vector<8x8xf32> to vector<8x8xbf16>
    %cst_20 = arith.constant dense<0.000000e+00> : vector<8x8xf32>
    %52 = tpu.matmul %50, %51, %cst_20 {dimension_numbers = #tpu.dot_dimension_numbers<[1], [1], [0], [0], [0, 0, 1, 0], [], []>} : vector<8x8xbf16>, vector<8x8xbf16>, vector<8x8xf32> -> vector<8x8xf32>
    %53 = vector.broadcast %19 : vector<1x8xf32> to vector<8x8xf32>
    %54 = arith.addf %52, %53 : vector<8x8xf32>
    %cst_21 = arith.constant dense<0xFF800000> : vector<8xf32>
    %55 = vector.multi_reduction <maximumf>, %54, %cst_21 [1] : vector<8x8xf32> to vector<8xf32>
    %56 = vector.shape_cast %55 : vector<8xf32> to vector<8x1xf32>
    %57 = vector.broadcast %56 : vector<8x1xf32> to vector<8x8xf32>
    %58 = arith.subf %54, %57 : vector<8x8xf32>
    %59 = math.exp %58 : vector<8x8xf32>
    %cst_22 = arith.constant dense<0.000000e+00> : vector<8xf32>
    %60 = vector.multi_reduction <add>, %59, %cst_22 [1] : vector<8x8xf32> to vector<8xf32>
    %61 = vector.shape_cast %60 : vector<8xf32> to vector<8x1xf32>
    %62 = tpu.reciprocal %61 {approx = true} : vector<8x1xf32> -> vector<8x1xf32>
    %63 = vector.broadcast %62 : vector<8x1xf32> to vector<8x8xf32>
    %64 = arith.mulf %59, %63 : vector<8x8xf32>
    %65 = arith.truncf %64 : vector<8x8xf32> to vector<8x8xbf16>
    %66 = arith.truncf %49 : vector<8x8xf32> to vector<8x8xbf16>
    %cst_23 = arith.constant dense<0.000000e+00> : vector<8x8xf32>
    %67 = tpu.matmul %65, %66, %cst_23 {dimension_numbers = #tpu.dot_dimension_numbers<[1], [0], [0], [1], [0, 0, 1, 1], [], []>} : vector<8x8xbf16>, vector<8x8xbf16>, vector<8x8xf32> -> vector<8x8xf32>
    %68 = vector.extract_strided_slice %14 {offsets = [8, 0], sizes = [8, 32], strides = [1, 1]} : vector<32x32xf32> to vector<8x32xf32>
    %69 = arith.truncf %67 : vector<8x8xf32> to vector<8x8xbf16>
    %70 = arith.truncf %68 : vector<8x32xf32> to vector<8x32xbf16>
    %cst_24 = arith.constant dense<0.000000e+00> : vector<8x32xf32>
    %71 = tpu.matmul %69, %70, %cst_24 {dimension_numbers = #tpu.dot_dimension_numbers<[1], [0], [0], [1], [0, 0, 1, 1], [], []>} : vector<8x8xbf16>, vector<8x32xbf16>, vector<8x32xf32> -> vector<8x32xf32>
    %72 = arith.addf %46, %71 : vector<8x32xf32>
    %73 = vector.extract_strided_slice %9 {offsets = [0, 16], sizes = [8, 8], strides = [1, 1]} : vector<8x32xf32> to vector<8x8xf32>
    %74 = vector.extract_strided_slice %10 {offsets = [0, 16], sizes = [8, 8], strides = [1, 1]} : vector<8x32xf32> to vector<8x8xf32>
    %75 = vector.extract_strided_slice %11 {offsets = [0, 16], sizes = [8, 8], strides = [1, 1]} : vector<8x32xf32> to vector<8x8xf32>
    %76 = arith.truncf %73 : vector<8x8xf32> to vector<8x8xbf16>
    %77 = arith.truncf %74 : vector<8x8xf32> to vector<8x8xbf16>
    %cst_25 = arith.constant dense<0.000000e+00> : vector<8x8xf32>
    %78 = tpu.matmul %76, %77, %cst_25 {dimension_numbers = #tpu.dot_dimension_numbers<[1], [1], [0], [0], [0, 0, 1, 0], [], []>} : vector<8x8xbf16>, vector<8x8xbf16>, vector<8x8xf32> -> vector<8x8xf32>
    %79 = vector.broadcast %19 : vector<1x8xf32> to vector<8x8xf32>
    %80 = arith.addf %78, %79 : vector<8x8xf32>
    %cst_26 = arith.constant dense<0xFF800000> : vector<8xf32>
    %81 = vector.multi_reduction <maximumf>, %80, %cst_26 [1] : vector<8x8xf32> to vector<8xf32>
    %82 = vector.shape_cast %81 : vector<8xf32> to vector<8x1xf32>
    %83 = vector.broadcast %82 : vector<8x1xf32> to vector<8x8xf32>
    %84 = arith.subf %80, %83 : vector<8x8xf32>
    %85 = math.exp %84 : vector<8x8xf32>
    %cst_27 = arith.constant dense<0.000000e+00> : vector<8xf32>
    %86 = vector.multi_reduction <add>, %85, %cst_27 [1] : vector<8x8xf32> to vector<8xf32>
    %87 = vector.shape_cast %86 : vector<8xf32> to vector<8x1xf32>
    %88 = tpu.reciprocal %87 {approx = true} : vector<8x1xf32> -> vector<8x1xf32>
    %89 = vector.broadcast %88 : vector<8x1xf32> to vector<8x8xf32>
    %90 = arith.mulf %85, %89 : vector<8x8xf32>
    %91 = arith.truncf %90 : vector<8x8xf32> to vector<8x8xbf16>
    %92 = arith.truncf %75 : vector<8x8xf32> to vector<8x8xbf16>
    %cst_28 = arith.constant dense<0.000000e+00> : vector<8x8xf32>
    %93 = tpu.matmul %91, %92, %cst_28 {dimension_numbers = #tpu.dot_dimension_numbers<[1], [0], [0], [1], [0, 0, 1, 1], [], []>} : vector<8x8xbf16>, vector<8x8xbf16>, vector<8x8xf32> -> vector<8x8xf32>
    %94 = vector.extract_strided_slice %14 {offsets = [16, 0], sizes = [8, 32], strides = [1, 1]} : vector<32x32xf32> to vector<8x32xf32>
    %95 = arith.truncf %93 : vector<8x8xf32> to vector<8x8xbf16>
    %96 = arith.truncf %94 : vector<8x32xf32> to vector<8x32xbf16>
    %cst_29 = arith.constant dense<0.000000e+00> : vector<8x32xf32>
    %97 = tpu.matmul %95, %96, %cst_29 {dimension_numbers = #tpu.dot_dimension_numbers<[1], [0], [0], [1], [0, 0, 1, 1], [], []>} : vector<8x8xbf16>, vector<8x32xbf16>, vector<8x32xf32> -> vector<8x32xf32>
    %98 = arith.addf %72, %97 : vector<8x32xf32>
    %99 = vector.extract_strided_slice %9 {offsets = [0, 24], sizes = [8, 8], strides = [1, 1]} : vector<8x32xf32> to vector<8x8xf32>
    %100 = vector.extract_strided_slice %10 {offsets = [0, 24], sizes = [8, 8], strides = [1, 1]} : vector<8x32xf32> to vector<8x8xf32>
    %101 = vector.extract_strided_slice %11 {offsets = [0, 24], sizes = [8, 8], strides = [1, 1]} : vector<8x32xf32> to vector<8x8xf32>
    %102 = arith.truncf %99 : vector<8x8xf32> to vector<8x8xbf16>
    %103 = arith.truncf %100 : vector<8x8xf32> to vector<8x8xbf16>
    %cst_30 = arith.constant dense<0.000000e+00> : vector<8x8xf32>
    %104 = tpu.matmul %102, %103, %cst_30 {dimension_numbers = #tpu.dot_dimension_numbers<[1], [1], [0], [0], [0, 0, 1, 0], [], []>} : vector<8x8xbf16>, vector<8x8xbf16>, vector<8x8xf32> -> vector<8x8xf32>
    %105 = vector.broadcast %19 : vector<1x8xf32> to vector<8x8xf32>
    %106 = arith.addf %104, %105 : vector<8x8xf32>
    %cst_31 = arith.constant dense<0xFF800000> : vector<8xf32>
    %107 = vector.multi_reduction <maximumf>, %106, %cst_31 [1] : vector<8x8xf32> to vector<8xf32>
    %108 = vector.shape_cast %107 : vector<8xf32> to vector<8x1xf32>
    %109 = vector.broadcast %108 : vector<8x1xf32> to vector<8x8xf32>
    %110 = arith.subf %106, %109 : vector<8x8xf32>
    %111 = math.exp %110 : vector<8x8xf32>
    %cst_32 = arith.constant dense<0.000000e+00> : vector<8xf32>
    %112 = vector.multi_reduction <add>, %111, %cst_32 [1] : vector<8x8xf32> to vector<8xf32>
    %113 = vector.shape_cast %112 : vector<8xf32> to vector<8x1xf32>
    %114 = tpu.reciprocal %113 {approx = true} : vector<8x1xf32> -> vector<8x1xf32>
    %115 = vector.broadcast %114 : vector<8x1xf32> to vector<8x8xf32>
    %116 = arith.mulf %111, %115 : vector<8x8xf32>
    %117 = arith.truncf %116 : vector<8x8xf32> to vector<8x8xbf16>
    %118 = arith.truncf %101 : vector<8x8xf32> to vector<8x8xbf16>
    %cst_33 = arith.constant dense<0.000000e+00> : vector<8x8xf32>
    %119 = tpu.matmul %117, %118, %cst_33 {dimension_numbers = #tpu.dot_dimension_numbers<[1], [0], [0], [1], [0, 0, 1, 1], [], []>} : vector<8x8xbf16>, vector<8x8xbf16>, vector<8x8xf32> -> vector<8x8xf32>
    %120 = vector.extract_strided_slice %14 {offsets = [24, 0], sizes = [8, 32], strides = [1, 1]} : vector<32x32xf32> to vector<8x32xf32>
    %121 = arith.truncf %119 : vector<8x8xf32> to vector<8x8xbf16>
    %122 = arith.truncf %120 : vector<8x32xf32> to vector<8x32xbf16>
    %cst_34 = arith.constant dense<0.000000e+00> : vector<8x32xf32>
    %123 = tpu.matmul %121, %122, %cst_34 {dimension_numbers = #tpu.dot_dimension_numbers<[1], [0], [0], [1], [0, 0, 1, 1], [], []>} : vector<8x8xbf16>, vector<8x32xbf16>, vector<8x32xf32> -> vector<8x32xf32>
    %124 = arith.addf %98, %123 : vector<8x32xf32>
    %c0_35 = arith.constant 0 : index
    %c0_36 = arith.constant 0 : index
    %125 = vector.load %arg6[%c0_35, %c0_36] : memref<1x32xf32, #tpu.memory_space<vmem>>, vector<1x32xf32>
    %126 = vector.broadcast %125 : vector<1x32xf32> to vector<8x32xf32>
    %127 = arith.addf %124, %126 : vector<8x32xf32>
    %c0_37 = arith.constant 0 : index
    %c0_38 = arith.constant 0 : index
    %c0_39 = arith.constant 0 : index
    %128 = vector.load %arg7[%c0_37, %c0_38, %c0_39] : memref<1x8x32xf32, #tpu.memory_space<vmem>>, vector<1x8x32xf32>
    %129 = vector.shape_cast %128 : vector<1x8x32xf32> to vector<8x32xf32>
    %130 = vector.shape_cast %127 : vector<8x32xf32> to vector<1x8x32xf32>
    tpu.vector_store %arg7[%c0_37, %c0_38, %c0_39], %130 {strides = array<i32>} : memref<1x8x32xf32, #tpu.memory_space<vmem>>, vector<1x8x32xf32>,
    return
  }
  func.func @transform_0(%arg0: i32) -> (i32, i32, i32) {
    %c0_i32 = arith.constant 0 : i32
    %c0_i32_0 = arith.constant 0 : i32
    %c0_i32_1 = arith.constant 0 : i32
    return %arg0, %c0_i32, %c0_i32_0 : i32, i32, i32
  }
  func.func @transform_1(%arg0: i32) -> (i32, i32, i32) {
    %c0_i32 = arith.constant 0 : i32
    %c0_i32_0 = arith.constant 0 : i32
    %c0_i32_1 = arith.constant 0 : i32
    return %arg0, %c0_i32, %c0_i32_0 : i32, i32, i32
  }
  func.func @transform_2(%arg0: i32) -> (i32, i32) {
    %c0_i32 = arith.constant 0 : i32
    %c0_i32_0 = arith.constant 0 : i32
    %c0_i32_1 = arith.constant 0 : i32
    return %c0_i32, %c0_i32_0 : i32, i32
  }
  func.func @transform_3(%arg0: i32) -> (i32, i32) {
    %c0_i32 = arith.constant 0 : i32
    %c0_i32_0 = arith.constant 0 : i32
    %c0_i32_1 = arith.constant 0 : i32
    return %c0_i32, %c0_i32_0 : i32, i32
  }
  func.func @transform_4(%arg0: i32) -> (i32, i32) {
    %c0_i32 = arith.constant 0 : i32
    %c0_i32_0 = arith.constant 0 : i32
    %c0_i32_1 = arith.constant 0 : i32
    return %c0_i32, %c0_i32_0 : i32, i32
  }
  func.func @transform_5(%arg0: i32) -> (i32, i32) {
    %c0_i32 = arith.constant 0 : i32
    %c0_i32_0 = arith.constant 0 : i32
    %c0_i32_1 = arith.constant 0 : i32
    return %c0_i32, %c0_i32_0 : i32, i32
  }
  func.func @transform_6(%arg0: i32) -> (i32, i32, i32) {
    %c0_i32 = arith.constant 0 : i32
    %c0_i32_0 = arith.constant 0 : i32
    %c0_i32_1 = arith.constant 0 : i32
    return %arg0, %c0_i32, %c0_i32_0 : i32, i32, i32
  }
}

module attributes {stable_mosaic.version = 11 : i64} {
  func.func @_mha_self_kernel(%arg0: i32, %arg1: memref<1x8x32xf32, #tpu.memory_space<vmem>>, %arg2: memref<1x1x8xf32, #tpu.memory_space<vmem>>, %arg3: memref<32x96xf32, #tpu.memory_space<vmem>>, %arg4: memref<1x96xf32, #tpu.memory_space<vmem>>, %arg5: memref<32x32xf32, #tpu.memory_space<vmem>>, %arg6: memref<1x32xf32, #tpu.memory_space<vmem>>, %arg7: memref<1x8x32xf32, #tpu.memory_space<vmem>>) attributes {dimension_semantics = [#tpu.dimension_semantics<parallel>], iteration_bounds = array<i64: 2>, scalar_prefetch = 0 : i64, scratch_operands = 0 : i64, tpu.core_type = #tpu.core_type<tc>, window_params = [{transform_indices = @transform_0, window_bounds = array<i64: 1, 8, 32>}, {transform_indices = @transform_1, window_bounds = array<i64: 1, 1, 8>}, {pipeline_mode = #tpu.pipeline_mode<synchronous>, transform_indices = @transform_2, window_bounds = array<i64: 32, 96>}, {pipeline_mode = #tpu.pipeline_mode<synchronous>, transform_indices = @transform_3, window_bounds = array<i64: 1, 96>}, {pipeline_mode = #tpu.pipeline_mode<synchronous>, transform_indices = @transform_4, window_bounds = array<i64: 32, 32>}, {pipeline_mode = #tpu.pipeline_mode<synchronous>, transform_indices = @transform_5, window_bounds = array<i64: 1, 32>}, {transform_indices = @transform_6, window_bounds = array<i64: 1, 8, 32>}]} {
    %c0 = arith.constant 0 : index
    %c0_0 = arith.constant 0 : index
    %c0_1 = arith.constant 0 : index
    %0 = vector.load %arg1[%c0, %c0_0, %c0_1] : memref<1x8x32xf32, #tpu.memory_space<vmem>>, vector<1x8x32xf32>
    %1 = vector.shape_cast %0 : vector<1x8x32xf32> to vector<8x32xf32>
    %c0_2 = arith.constant 0 : index
    %c0_3 = arith.constant 0 : index
    %2 = vector.load %arg3[%c0_2, %c0_3] : memref<32x96xf32, #tpu.memory_space<vmem>>, vector<32x96xf32>
    %3 = arith.truncf %1 : vector<8x32xf32> to vector<8x32xbf16>
    %4 = arith.truncf %2 : vector<32x96xf32> to vector<32x96xbf16>
    %cst = arith.constant dense<0.000000e+00> : vector<8x96xf32>
    %5 = tpu.matmul %3, %4, %cst {dimension_numbers = #tpu.dot_dimension_numbers<[1], [0], [0], [1], [0, 0, 1, 1], [], []>} : vector<8x32xbf16>, vector<32x96xbf16>, vector<8x96xf32> -> vector<8x96xf32>
    %c0_4 = arith.constant 0 : index
    %c0_5 = arith.constant 0 : index
    %6 = vector.load %arg4[%c0_4, %c0_5] : memref<1x96xf32, #tpu.memory_space<vmem>>, vector<1x96xf32>
    %7 = vector.broadcast %6 : vector<1x96xf32> to vector<8x96xf32>
    %8 = arith.addf %5, %7 : vector<8x96xf32>
    %9 = vector.extract_strided_slice %8 {offsets = [0, 0], sizes = [8, 32], strides = [1, 1]} : vector<8x96xf32> to vector<8x32xf32>
    %10 = vector.extract_strided_slice %8 {offsets = [0, 32], sizes = [8, 32], strides = [1, 1]} : vector<8x96xf32> to vector<8x32xf32>
    %11 = vector.extract_strided_slice %8 {offsets = [0, 64], sizes = [8, 32], strides = [1, 1]} : vector<8x96xf32> to vector<8x32xf32>
    %c0_6 = arith.constant 0 : index
    %c0_7 = arith.constant 0 : index
    %c0_8 = arith.constant 0 : index
    %12 = vector.load %arg2[%c0_6, %c0_7, %c0_8] : memref<1x1x8xf32, #tpu.memory_space<vmem>>, vector<1x1x8xf32>
    %13 = vector.shape_cast %12 : vector<1x1x8xf32> to vector<1x8xf32>
    %c0_9 = arith.constant 0 : index
    %c0_10 = arith.constant 0 : index
    %14 = vector.load %arg5[%c0_9, %c0_10] : memref<32x32xf32, #tpu.memory_space<vmem>>, vector<32x32xf32>
    %cst_11 = arith.constant 0.000000e+00 : f32
    %15 = vector.broadcast %cst_11 : f32 to vector<1x8xf32>
    %16 = arith.cmpf oeq, %13, %15 : vector<1x8xf32>
    %cst_12 = arith.constant -1.000000e+09 : f32
    %cst_13 = arith.constant 0.000000e+00 : f32
    %17 = vector.broadcast %cst_12 : f32 to vector<1x8xf32>
    %18 = vector.broadcast %cst_13 : f32 to vector<1x8xf32>
    %19 = arith.select %16, %17, %18 : vector<1x8xi1>, vector<1x8xf32>
    %cst_14 = arith.constant 0.000000e+00 : f32
    %20 = vector.broadcast %cst_14 : f32 to vector<8x32xf32>
    %21 = vector.extract_strided_slice %9 {offsets = [0, 0], sizes = [8, 8], strides = [1, 1]} : vector<8x32xf32> to vector<8x8xf32>
    %22 = vector.extract_strided_slice %10 {offsets = [0, 0], sizes = [8, 8], strides = [1, 1]} : vector<8x32xf32> to vector<8x8xf32>
    %23 = vector.extract_strided_slice %11 {offsets = [0, 0], sizes = [8, 8], strides = [1, 1]} : vector<8x32xf32> to vector<8x8xf32>
    %24 = arith.truncf %21 : vector<8x8xf32> to vector<8x8xbf16>
    %25 = arith.truncf %22 : vector<8x8xf32> to vector<8x8xbf16>
    %cst_15 = arith.constant dense<0.000000e+00> : vector<8x8xf32>
    %26 = tpu.matmul %24, %25, %cst_15 {dimension_numbers = #tpu.dot_dimension_numbers<[1], [1], [0], [0], [0, 0, 1, 0], [], []>} : vector<8x8xbf16>, vector<8x8xbf16>, vector<8x8xf32> -> vector<8x8xf32>
    %27 = vector.broadcast %19 : vector<1x8xf32> to vector<8x8xf32>
    %28 = arith.addf %26, %27 : vector<8x8xf32>
    %cst_16 = arith.constant dense<0xFF800000> : vector<8xf32>
    %29 = vector.multi_reduction <maximumf>, %28, %cst_16 [1] : vector<8x8xf32> to vector<8xf32>
    %30 = vector.shape_cast %29 : vector<8xf32> to vector<8x1xf32>
    %31 = vector.broadcast %30 : vector<8x1xf32> to vector<8x8xf32>
    %32 = arith.subf %28, %31 : vector<8x8xf32>
    %33 = math.exp %32 : vector<8x8xf32>
    %cst_17 = arith.constant dense<0.000000e+00> : vector<8xf32>
    %34 = vector.multi_reduction <add>, %33, %cst_17 [1] : vector<8x8xf32> to vector<8xf32>
    %35 = vector.shape_cast %34 : vector<8xf32> to vector<8x1xf32>
    %36 = tpu.reciprocal %35 {approx = true} : vector<8x1xf32> -> vector<8x1xf32>
    %37 = vector.broadcast %36 : vector<8x1xf32> to vector<8x8xf32>
    %38 = arith.mulf %33, %37 : vector<8x8xf32>
    %39 = arith.truncf %38 : vector<8x8xf32> to vector<8x8xbf16>
    %40 = arith.truncf %23 : vector<8x8xf32> to vector<8x8xbf16>
    %cst_18 = arith.constant dense<0.000000e+00> : vector<8x8xf32>
    %41 = tpu.matmul %39, %40, %cst_18 {dimension_numbers = #tpu.dot_dimension_numbers<[1], [0], [0], [1], [0, 0, 1, 1], [], []>} : vector<8x8xbf16>, vector<8x8xbf16>, vector<8x8xf32> -> vector<8x8xf32>
    %42 = vector.extract_strided_slice %14 {offsets = [0, 0], sizes = [8, 32], strides = [1, 1]} : vector<32x32xf32> to vector<8x32xf32>
    %43 = arith.truncf %41 : vector<8x8xf32> to vector<8x8xbf16>
    %44 = arith.truncf %42 : vector<8x32xf32> to vector<8x32xbf16>
    %cst_19 = arith.constant dense<0.000000e+00> : vector<8x32xf32>
    %45 = tpu.matmul %43, %44, %cst_19 {dimension_numbers = #tpu.dot_dimension_numbers<[1], [0], [0], [1], [0, 0, 1, 1], [], []>} : vector<8x8xbf16>, vector<8x32xbf16>, vector<8x32xf32> -> vector<8x32xf32>
    %46 = arith.addf %20, %45 : vector<8x32xf32>
    %47 = vector.extract_strided_slice %9 {offsets = [0, 8], sizes = [8, 8], strides = [1, 1]} : vector<8x32xf32> to vector<8x8xf32>
    %48 = vector.extract_strided_slice %10 {offsets = [0, 8], sizes = [8, 8], strides = [1, 1]} : vector<8x32xf32> to vector<8x8xf32>
    %49 = vector.extract_strided_slice %11 {offsets = [0, 8], sizes = [8, 8], strides = [1, 1]} : vector<8x32xf32> to vector<8x8xf32>
    %50 = arith.truncf %47 : vector<8x8xf32> to vector<8x8xbf16>
    %51 = arith.truncf %48 : vector<8x8xf32> to vector<8x8xbf16>
    %cst_20 = arith.constant dense<0.000000e+00> : vector<8x8xf32>
    %52 = tpu.matmul %50, %51, %cst_20 {dimension_numbers = #tpu.dot_dimension_numbers<[1], [1], [0], [0], [0, 0, 1, 0], [], []>} : vector<8x8xbf16>, vector<8x8xbf16>, vector<8x8xf32> -> vector<8x8xf32>
    %53 = vector.broadcast %19 : vector<1x8xf32> to vector<8x8xf32>
    %54 = arith.addf %52, %53 : vector<8x8xf32>
    %cst_21 = arith.constant dense<0xFF800000> : vector<8xf32>
    %55 = vector.multi_reduction <maximumf>, %54, %cst_21 [1] : vector<8x8xf32> to vector<8xf32>
    %56 = vector.shape_cast %55 : vector<8xf32> to vector<8x1xf32>
    %57 = vector.broadcast %56 : vector<8x1xf32> to vector<8x8xf32>
    %58 = arith.subf %54, %57 : vector<8x8xf32>
    %59 = math.exp %58 : vector<8x8xf32>
    %cst_22 = arith.constant dense<0.000000e+00> : vector<8xf32>
    %60 = vector.multi_reduction <add>, %59, %cst_22 [1] : vector<8x8xf32> to vector<8xf32>
    %61 = vector.shape_cast %60 : vector<8xf32> to vector<8x1xf32>
    %62 = tpu.reciprocal %61 {approx = true} : vector<8x1xf32> -> vector<8x1xf32>
    %63 = vector.broadcast %62 : vector<8x1xf32> to vector<8x8xf32>
    %64 = arith.mulf %59, %63 : vector<8x8xf32>
    %65 = arith.truncf %64 : vector<8x8xf32> to vector<8x8xbf16>
    %66 = arith.truncf %49 : vector<8x8xf32> to vector<8x8xbf16>
    %cst_23 = arith.constant dense<0.000000e+00> : vector<8x8xf32>
    %67 = tpu.matmul %65, %66, %cst_23 {dimension_numbers = #tpu.dot_dimension_numbers<[1], [0], [0], [1], [0, 0, 1, 1], [], []>} : vector<8x8xbf16>, vector<8x8xbf16>, vector<8x8xf32> -> vector<8x8xf32>
    %68 = vector.extract_strided_slice %14 {offsets = [8, 0], sizes = [8, 32], strides = [1, 1]} : vector<32x32xf32> to vector<8x32xf32>
    %69 = arith.truncf %67 : vector<8x8xf32> to vector<8x8xbf16>
    %70 = arith.truncf %68 : vector<8x32xf32> to vector<8x32xbf16>
    %cst_24 = arith.constant dense<0.000000e+00> : vector<8x32xf32>
    %71 = tpu.matmul %69, %70, %cst_24 {dimension_numbers = #tpu.dot_dimension_numbers<[1], [0], [0], [1], [0, 0, 1, 1], [], []>} : vector<8x8xbf16>, vector<8x32xbf16>, vector<8x32xf32> -> vector<8x32xf32>
    %72 = arith.addf %46, %71 : vector<8x32xf32>
    %73 = vector.extract_strided_slice %9 {offsets = [0, 16], sizes = [8, 8], strides = [1, 1]} : vector<8x32xf32> to vector<8x8xf32>
    %74 = vector.extract_strided_slice %10 {offsets = [0, 16], sizes = [8, 8], strides = [1, 1]} : vector<8x32xf32> to vector<8x8xf32>
    %75 = vector.extract_strided_slice %11 {offsets = [0, 16], sizes = [8, 8], strides = [1, 1]} : vector<8x32xf32> to vector<8x8xf32>
    %76 = arith.truncf %73 : vector<8x8xf32> to vector<8x8xbf16>
    %77 = arith.truncf %74 : vector<8x8xf32> to vector<8x8xbf16>
    %cst_25 = arith.constant dense<0.000000e+00> : vector<8x8xf32>
    %78 = tpu.matmul %76, %77, %cst_25 {dimension_numbers = #tpu.dot_dimension_numbers<[1], [1], [0], [0], [0, 0, 1, 0], [], []>} : vector<8x8xbf16>, vector<8x8xbf16>, vector<8x8xf32> -> vector<8x8xf32>
    %79 = vector.broadcast %19 : vector<1x8xf32> to vector<8x8xf32>
    %80 = arith.addf %78, %79 : vector<8x8xf32>
    %cst_26 = arith.constant dense<0xFF800000> : vector<8xf32>
    %81 = vector.multi_reduction <maximumf>, %80, %cst_26 [1] : vector<8x8xf32> to vector<8xf32>
    %82 = vector.shape_cast %81 : vector<8xf32> to vector<8x1xf32>
    %83 = vector.broadcast %82 : vector<8x1xf32> to vector<8x8xf32>
    %84 = arith.subf %80, %83 : vector<8x8xf32>
    %85 = math.exp %84 : vector<8x8xf32>
    %cst_27 = arith.constant dense<0.000000e+00> : vector<8xf32>
    %86 = vector.multi_reduction <add>, %85, %cst_27 [1] : vector<8x8xf32> to vector<8xf32>
    %87 = vector.shape_cast %86 : vector<8xf32> to vector<8x1xf32>
    %88 = tpu.reciprocal %87 {approx = true} : vector<8x1xf32> -> vector<8x1xf32>
    %89 = vector.broadcast %88 : vector<8x1xf32> to vector<8x8xf32>
    %90 = arith.mulf %85, %89 : vector<8x8xf32>
    %91 = arith.truncf %90 : vector<8x8xf32> to vector<8x8xbf16>
    %92 = arith.truncf %75 : vector<8x8xf32> to vector<8x8xbf16>
    %cst_28 = arith.constant dense<0.000000e+00> : vector<8x8xf32>
    %93 = tpu.matmul %91, %92, %cst_28 {dimension_numbers = #tpu.dot_dimension_numbers<[1], [0], [0], [1], [0, 0, 1, 1], [], []>} : vector<8x8xbf16>, vector<8x8xbf16>, vector<8x8xf32> -> vector<8x8xf32>
    %94 = vector.extract_strided_slice %14 {offsets = [16, 0], sizes = [8, 32], strides = [1, 1]} : vector<32x32xf32> to vector<8x32xf32>
    %95 = arith.truncf %93 : vector<8x8xf32> to vector<8x8xbf16>
    %96 = arith.truncf %94 : vector<8x32xf32> to vector<8x32xbf16>
    %cst_29 = arith.constant dense<0.000000e+00> : vector<8x32xf32>
    %97 = tpu.matmul %95, %96, %cst_29 {dimension_numbers = #tpu.dot_dimension_numbers<[1], [0], [0], [1], [0, 0, 1, 1], [], []>} : vector<8x8xbf16>, vector<8x32xbf16>, vector<8x32xf32> -> vector<8x32xf32>
    %98 = arith.addf %72, %97 : vector<8x32xf32>
    %99 = vector.extract_strided_slice %9 {offsets = [0, 24], sizes = [8, 8], strides = [1, 1]} : vector<8x32xf32> to vector<8x8xf32>
    %100 = vector.extract_strided_slice %10 {offsets = [0, 24], sizes = [8, 8], strides = [1, 1]} : vector<8x32xf32> to vector<8x8xf32>
    %101 = vector.extract_strided_slice %11 {offsets = [0, 24], sizes = [8, 8], strides = [1, 1]} : vector<8x32xf32> to vector<8x8xf32>
    %102 = arith.truncf %99 : vector<8x8xf32> to vector<8x8xbf16>
    %103 = arith.truncf %100 : vector<8x8xf32> to vector<8x8xbf16>
    %cst_30 = arith.constant dense<0.000000e+00> : vector<8x8xf32>
    %104 = tpu.matmul %102, %103, %cst_30 {dimension_numbers = #tpu.dot_dimension_numbers<[1], [1], [0], [0], [0, 0, 1, 0], [], []>} : vector<8x8xbf16>, vector<8x8xbf16>, vector<8x8xf32> -> vector<8x8xf32>
    %105 = vector.broadcast %19 : vector<1x8xf32> to vector<8x8xf32>
    %106 = arith.addf %104, %105 : vector<8x8xf32>
    %cst_31 = arith.constant dense<0xFF800000> : vector<8xf32>
    %107 = vector.multi_reduction <maximumf>, %106, %cst_31 [1] : vector<8x8xf32> to vector<8xf32>
    %108 = vector.shape_cast %107 : vector<8xf32> to vector<8x1xf32>
    %109 = vector.broadcast %108 : vector<8x1xf32> to vector<8x8xf32>
    %110 = arith.subf %106, %109 : vector<8x8xf32>
    %111 = math.exp %110 : vector<8x8xf32>
    %cst_32 = arith.constant dense<0.000000e+00> : vector<8xf32>
    %112 = vector.multi_reduction <add>, %111, %cst_32 [1] : vector<8x8xf32> to vector<8xf32>
    %113 = vector.shape_cast %112 : vector<8xf32> to vector<8x1xf32>
    %114 = tpu.reciprocal %113 {approx = true} : vector<8x1xf32> -> vector<8x1xf32>
    %115 = vector.broadcast %114 : vector<8x1xf32> to vector<8x8xf32>
    %116 = arith.mulf %111, %115 : vector<8x8xf32>
    %117 = arith.truncf %116 : vector<8x8xf32> to vector<8x8xbf16>
    %118 = arith.truncf %101 : vector<8x8xf32> to vector<8x8xbf16>
    %cst_33 = arith.constant dense<0.000000e+00> : vector<8x8xf32>
    %119 = tpu.matmul %117, %118, %cst_33 {dimension_numbers = #tpu.dot_dimension_numbers<[1], [0], [0], [1], [0, 0, 1, 1], [], []>} : vector<8x8xbf16>, vector<8x8xbf16>, vector<8x8xf32> -> vector<8x8xf32>
    %120 = vector.extract_strided_slice %14 {offsets = [24, 0], sizes = [8, 32], strides = [1, 1]} : vector<32x32xf32> to vector<8x32xf32>
    %121 = arith.truncf %119 : vector<8x8xf32> to vector<8x8xbf16>
    %122 = arith.truncf %120 : vector<8x32xf32> to vector<8x32xbf16>
    %cst_34 = arith.constant dense<0.000000e+00> : vector<8x32xf32>
    %123 = tpu.matmul %121, %122, %cst_34 {dimension_numbers = #tpu.dot_dimension_numbers<[1], [0], [0], [1], [0, 0, 1, 1], [], []>} : vector<8x8xbf16>, vector<8x32xbf16>, vector<8x32xf32> -> vector<8x32xf32>
    %124 = arith.addf %98, %123 : vector<8x32xf32>
    %c0_35 = arith.constant 0 : index
    %c0_36 = arith.constant 0 : index
    %125 = vector.load %arg6[%c0_35, %c0_36] : memref<1x32xf32, #tpu.memory_space<vmem>>, vector<1x32xf32>
    %126 = vector.broadcast %125 : vector<1x32xf32> to vector<8x32xf32>
    %127 = arith.addf %124, %126 : vector<8x32xf32>
    %c0_37 = arith.constant 0 : index
    %c0_38 = arith.constant 0 : index
    %c0_39 = arith.constant 0 : index
    %128 = vector.load %arg7[%c0_37, %c0_38, %c0_39] : memref<1x8x32xf32, #tpu.memory_space<vmem>>, vector<1x8x32xf32>
    %129 = vector.shape_cast %128 : vector<1x8x32xf32> to vector<8x32xf32>
    %130 = vector.shape_cast %127 : vector<8x32xf32> to vector<1x8x32xf32>
    tpu.vector_store %arg7[%c0_37, %c0_38, %c0_39], %130 {strides = array<i32>} : memref<1x8x32xf32, #tpu.memory_space<vmem>>, vector<1x8x32xf32>,
    return
  }
  func.func @transform_0(%arg0: i32) -> (i32, i32, i32) {
    %c0_i32 = arith.constant 0 : i32
    %c0_i32_0 = arith.constant 0 : i32
    %c0_i32_1 = arith.constant 0 : i32
    return %arg0, %c0_i32, %c0_i32_0 : i32, i32, i32
  }
  func.func @transform_1(%arg0: i32) -> (i32, i32, i32) {
    %c0_i32 = arith.constant 0 : i32
    %c0_i32_0 = arith.constant 0 : i32
    %c0_i32_1 = arith.constant 0 : i32
    return %arg0, %c0_i32, %c0_i32_0 : i32, i32, i32
  }
  func.func @transform_2(%arg0: i32) -> (i32, i32) {
    %c0_i32 = arith.constant 0 : i32
    %c0_i32_0 = arith.constant 0 : i32
    %c0_i32_1 = arith.constant 0 : i32
    return %c0_i32, %c0_i32_0 : i32, i32
  }
  func.func @transform_3(%arg0: i32) -> (i32, i32) {
    %c0_i32 = arith.constant 0 : i32
    %c0_i32_0 = arith.constant 0 : i32
    %c0_i32_1 = arith.constant 0 : i32
    return %c0_i32, %c0_i32_0 : i32, i32
  }
  func.func @transform_4(%arg0: i32) -> (i32, i32) {
    %c0_i32 = arith.constant 0 : i32
    %c0_i32_0 = arith.constant 0 : i32
    %c0_i32_1 = arith.constant 0 : i32
    return %c0_i32, %c0_i32_0 : i32, i32
  }
  func.func @transform_5(%arg0: i32) -> (i32, i32) {
    %c0_i32 = arith.constant 0 : i32
    %c0_i32_0 = arith.constant 0 : i32
    %c0_i32_1 = arith.constant 0 : i32
    return %c0_i32, %c0_i32_0 : i32, i32
  }
  func.func @transform_6(%arg0: i32) -> (i32, i32, i32) {
    %c0_i32 = arith.constant 0 : i32
    %c0_i32_0 = arith.constant 0 : i32
    %c0_i32_1 = arith.constant 0 : i32
    return %arg0, %c0_i32, %c0_i32_0 : i32, i32, i32
  }
}

</mosaic_0001>

<llo_original>
// kernel: tpu_custom_call.1
$region0: #{tpu_custom_call.1}
  #allocation0 [shape = 'u32[]', space=smem, size = 0x4, offset = 0x4, fixed_abs, tag = 'smem constant byte address 0x4 - core index']
  #allocation1 [shape = 'u32[144,128]{1,0:T(1,128)}', space=vmem, size = 0x12000, scoped, tag = 'internal scratch']
  %s0 = inlined_call_operand.hbm [shape: f32[2,8,32], index: 0, kind: input, shape index: {}]
  %s1 = inlined_call_operand.vmem [shape: f32[2,1,8], index: 1, kind: input, shape index: {}]
  %s2 = inlined_call_operand.hbm [shape: f32[32,96], index: 2, kind: input, shape index: {}]
  %s3 = inlined_call_operand.vmem [shape: f32[1,96], index: 3, kind: input, shape index: {}]
  %s4 = inlined_call_operand.hbm [shape: f32[32,32], index: 4, kind: input, shape index: {}]
  %s5 = inlined_call_operand.vmem [shape: f32[1,32], index: 5, kind: input, shape index: {}]
  %s6 = inlined_call_operand.hbm [shape: f32[2,8,32], index: 6, kind: output, shape index: {}]
  %s7 = sld [smem:[#allocation0]]
  $region69: #{tpu_custom_call.1} parent=0
    _
  %s9 = ssub.s32 1, %s7
  %s10 = scalar_select 0, %s9, %s7
  $region1: #{tpu_custom_call.1} parent=0
    #allocation2 [shape = 'u8[8192]{0}', space=vmem, size = 0x2000, scoped, tag = 'input window, operand 0']
    #allocation3 [shape = 's32[2]{0}', space=sflag, size = 0x8, scoped, tag = 'scoped memory for tpu_custom_call.1']
    #allocation4 [shape = 's32[2]{0}', space=sflag, size = 0x8, scoped, tag = 'scoped memory for tpu_custom_call.1']
    #allocation5 [shape = 'u8[16384]{0}', space=vmem, size = 0x4000, scoped, tag = 'input window, operand 2, single buffered']
    #allocation6 [shape = 's32[1]{0}', space=sflag, size = 0x4, scoped, tag = 'scoped memory for tpu_custom_call.1']
    #allocation7 [shape = 'u8[16384]{0}', space=vmem, size = 0x4000, scoped, tag = 'input window, operand 4, single buffered']
    #allocation8 [shape = 'u8[8192]{0}', space=vmem, size = 0x2000, scoped, tag = 'output window, operand 0']
    %11 = vsyncpa [#allocation3], 0
    %s12 = scalar_lea.sflag [#allocation3], 1
    %13 = vsyncpa %s12, 0
    %14 = vsyncpa [#allocation6], 0
    %15 = vsyncpa [#allocation4], 0
    %s16 = scalar_lea.sflag [#allocation4], 1
    %17 = vsyncpa %s16, 0
    loop: start=0, step=1, limit=4
    $region2: #{tpu_custom_call.1} parent=1 // loop_pre_header
      _
    $region3: #{tpu_custom_call.1} parent=1 // loop_header
      %s19 = sphi 0, %s23
      %p20 = scmp.ge.s32.totalorder %s19, 4
      %s29 = sphi 0, %s31
      %s32 = sphi 0, %s29
      %s33 = sphi 0, %s32
      %s49 = sphi 0, %s33
      %s55 = sphi 0, %s57
      %s58 = sphi 0, %s55
      %s59 = sphi 0, %s58
      %s75 = sphi 0, %s59
      %s79 = sphi 0, %s79
      %s81 = sphi 0, %s79
      %s82 = sphi 0, %s81
      %s96 = sphi 0, %s82
      %s100 = sphi 0, %s100
      %s102 = sphi 0, %s100
      %s103 = sphi 0, %s102
      %s117 = sphi 0, %s103
      %s121 = sphi 0, %s121
      %s123 = sphi 0, %s121
      %s124 = sphi 0, %s123
      %s138 = sphi 0, %s124
      %s142 = sphi 0, %s142
      %s144 = sphi 0, %s142
      %s145 = sphi 0, %s144
      %s159 = sphi 0, %s145
      %s165 = sphi 0, %s167
      %s168 = sphi 0, %s165
      %s169 = sphi 0, %s168
      %s185 = sphi 0, %s169
    $region4: #{tpu_custom_call.1} parent=1 // loop_header_branch
      %22 = sbr.rel (%p20) target = $region8
    $region5: #{tpu_custom_call.1} parent=1 // loop_body
      %s24 = ssub.s32 %s19, 1
      %s25 = ssub.s32 %s19, 2
      %s26 = sadd.s32 %s19, 1
      %s27 = ssub.s32 %s19, %s26
      %p28 = scmp.eq.s32.totalorder %s27, 0
      %s30 = sadd.s32 %s29, 1
      %s31 = scalar_select %p28, %s29, %s30
      %p34 = pneg %p28
      %p35 = scmp.eq.s32.totalorder %s19, 1
      %p36 = por %p34, %p35
      %p37 = scmp.ne.s32.totalorder %s29, %s32
      %p38 = scmp.eq.s32.totalorder %s19, 0
      %p39 = por %p37, %p38
      %p40 = scmp.ne.s32.totalorder %s29, %s32
      %p41 = scmp.eq.s32.totalorder %s24, 1
      %p42 = por %p40, %p41
      %p43 = scmp.ne.s32.totalorder %s32, %s33
      %p44 = scmp.eq.s32.totalorder %s24, 0
      %p45 = por %p43, %p44
      %p46 = scmp.ne.s32.totalorder %s32, %s33
      %p47 = scmp.eq.s32.totalorder %s25, 1
      %p48 = por %p46, %p47
      %p50 = scmp.ne.s32.totalorder %s33, %s49
      %p51 = scmp.eq.s32.totalorder %s25, 0
      %p52 = por %p50, %p51
      %s53 = ssub.s32 %s19, %s26
      %p54 = scmp.eq.s32.totalorder %s53, 0
      %s56 = sadd.s32 %s55, 1
      %s57 = scalar_select %p54, %s55, %s56
      %p60 = pneg %p54
      %p61 = scmp.eq.s32.totalorder %s19, 1
      %p62 = por %p60, %p61
      %p63 = scmp.ne.s32.totalorder %s55, %s58
      %p64 = scmp.eq.s32.totalorder %s19, 0
      %p65 = por %p63, %p64
      %p66 = scmp.ne.s32.totalorder %s55, %s58
      %p67 = scmp.eq.s32.totalorder %s24, 1
      %p68 = por %p66, %p67
      %p69 = scmp.ne.s32.totalorder %s58, %s59
      %p70 = scmp.eq.s32.totalorder %s24, 0
      %p71 = por %p69, %p70
      %p72 = scmp.ne.s32.totalorder %s58, %s59
      %p73 = scmp.eq.s32.totalorder %s25, 1
      %p74 = por %p72, %p73
      %p76 = scmp.ne.s32.totalorder %s59, %s75
      %p77 = scmp.eq.s32.totalorder %s25, 0
      %p78 = por %p76, %p77
      %s80 = sadd.s32 %s79, 1
      %p83 = scmp.eq.s32.totalorder %s19, 1
      %p84 = scmp.ne.s32.totalorder %s79, %s81
      %p85 = scmp.eq.s32.totalorder %s19, 0
      %p86 = por %p84, %p85
      %p87 = scmp.ne.s32.totalorder %s79, %s81
      %p88 = scmp.eq.s32.totalorder %s24, 1
      %p89 = por %p87, %p88
      %p90 = scmp.ne.s32.totalorder %s81, %s82
      %p91 = scmp.eq.s32.totalorder %s24, 0
      %p92 = por %p90, %p91
      %p93 = scmp.ne.s32.totalorder %s81, %s82
      %p94 = scmp.eq.s32.totalorder %s25, 1
      %p95 = por %p93, %p94
      %p97 = scmp.ne.s32.totalorder %s82, %s96
      %p98 = scmp.eq.s32.totalorder %s25, 0
      %p99 = por %p97, %p98
      %s101 = sadd.s32 %s100, 1
      %p104 = scmp.eq.s32.totalorder %s19, 1
      %p105 = scmp.ne.s32.totalorder %s100, %s102
      %p106 = scmp.eq.s32.totalorder %s19, 0
      %p107 = por %p105, %p106
      %p108 = scmp.ne.s32.totalorder %s100, %s102
      %p109 = scmp.eq.s32.totalorder %s24, 1
      %p110 = por %p108, %p109
      %p111 = scmp.ne.s32.totalorder %s102, %s103
      %p112 = scmp.eq.s32.totalorder %s24, 0
      %p113 = por %p111, %p112
      %p114 = scmp.ne.s32.totalorder %s102, %s103
      %p115 = scmp.eq.s32.totalorder %s25, 1
      %p116 = por %p114, %p115
      %p118 = scmp.ne.s32.totalorder %s103, %s117
      %p119 = scmp.eq.s32.totalorder %s25, 0
      %p120 = por %p118, %p119
      %s122 = sadd.s32 %s121, 1
      %p125 = scmp.eq.s32.totalorder %s19, 1
      %p126 = scmp.ne.s32.totalorder %s121, %s123
      %p127 = scmp.eq.s32.totalorder %s19, 0
      %p128 = por %p126, %p127
      %p129 = scmp.ne.s32.totalorder %s121, %s123
      %p130 = scmp.eq.s32.totalorder %s24, 1
      %p131 = por %p129, %p130
      %p132 = scmp.ne.s32.totalorder %s123, %s124
      %p133 = scmp.eq.s32.totalorder %s24, 0
      %p134 = por %p132, %p133
      %p135 = scmp.ne.s32.totalorder %s123, %s124
      %p136 = scmp.eq.s32.totalorder %s25, 1
      %p137 = por %p135, %p136
      %p139 = scmp.ne.s32.totalorder %s124, %s138
      %p140 = scmp.eq.s32.totalorder %s25, 0
      %p141 = por %p139, %p140
      %s143 = sadd.s32 %s142, 1
      %p146 = scmp.eq.s32.totalorder %s19, 1
      %p147 = scmp.ne.s32.totalorder %s142, %s144
      %p148 = scmp.eq.s32.totalorder %s19, 0
      %p149 = por %p147, %p148
      %p150 = scmp.ne.s32.totalorder %s142, %s144
      %p151 = scmp.eq.s32.totalorder %s24, 1
      %p152 = por %p150, %p151
      %p153 = scmp.ne.s32.totalorder %s144, %s145
      %p154 = scmp.eq.s32.totalorder %s24, 0
      %p155 = por %p153, %p154
      %p156 = scmp.ne.s32.totalorder %s144, %s145
      %p157 = scmp.eq.s32.totalorder %s25, 1
      %p158 = por %p156, %p157
      %p160 = scmp.ne.s32.totalorder %s145, %s159
      %p161 = scmp.eq.s32.totalorder %s25, 0
      %p162 = por %p160, %p161
      %s163 = ssub.s32 %s19, %s26
      %p164 = scmp.eq.s32.totalorder %s163, 0
      %s166 = sadd.s32 %s165, 1
      %s167 = scalar_select %p164, %s165, %s166
      %p170 = pneg %p164
      %p171 = scmp.eq.s32.totalorder %s19, 1
      %p172 = por %p170, %p171
      %p173 = scmp.ne.s32.totalorder %s165, %s168
      %p174 = scmp.eq.s32.totalorder %s19, 0
      %p175 = por %p173, %p174
      %p176 = scmp.ne.s32.totalorder %s165, %s168
      %p177 = scmp.eq.s32.totalorder %s24, 1
      %p178 = por %p176, %p177
      %p179 = scmp.ne.s32.totalorder %s168, %s169
      %p180 = scmp.eq.s32.totalorder %s24, 0
      %p181 = por %p179, %p180
      %p182 = scmp.ne.s32.totalorder %s168, %s169
      %p183 = scmp.eq.s32.totalorder %s25, 1
      %p184 = por %p182, %p183
      %p186 = scmp.ne.s32.totalorder %s169, %s185
      %p187 = scmp.eq.s32.totalorder %s25, 0
      %p188 = por %p186, %p187
      %p189 = scmp.le.s32.totalorder 1, %s19
      %p190 = scmp.lt.s32.totalorder %s19, 3
      %p191 = pnand %p189, %p190
      %p192 = pneg %p191
      // Predicated region
      $region9: #{tpu_custom_call.1} parent=5 // pred_check
        _
      $region10: #{tpu_custom_call.1} parent=5 // pred_check_branch
        %194 = sbr.rel (%p191) target = $region12
      $region11: #{tpu_custom_call.1} parent=5 // pred_region
        %s195 = ssub.s32 %s19, 1
        // Predicated region
        $region13: #{tpu_custom_call.1} parent=11 // pred_check
          %p196 = pneg %p92
        $region14: #{tpu_custom_call.1} parent=11 // pred_check_branch
          %198 = sbr.rel (%p196) target = $region16
        $region15: #{tpu_custom_call.1} parent=11 // pred_region
          %s200 = ssub.s32 512, 512
          %201 = vsyncadd [#allocation6], %s200
          %s202 = sshll.u32 [#allocation5], 4
          %s203 = int_to_ptr.vmem [resolvable:$true] %s202
          %208 = dma.hbm_to_vmem [thread:$0]  %s2, 512, %s203, [#allocation6], 128, 128, 8
        $region16: #{tpu_custom_call.1} parent=11 // pred_fallthru
          _
        // Predicated region
        $region17: #{tpu_custom_call.1} parent=11 // pred_check
          %p209 = pneg %p113
        $region18: #{tpu_custom_call.1} parent=11 // pred_check_branch
          %211 = sbr.rel (%p209) target = $region20
        $region19: #{tpu_custom_call.1} parent=11 // pred_region
          _
        $region20: #{tpu_custom_call.1} parent=11 // pred_fallthru
          _
        // Predicated region
        $region21: #{tpu_custom_call.1} parent=11 // pred_check
          %p212 = pneg %p134
        $region22: #{tpu_custom_call.1} parent=11 // pred_check_branch
          %214 = sbr.rel (%p212) target = $region24
        $region23: #{tpu_custom_call.1} parent=11 // pred_region
          %s216 = ssub.s32 512, 512
          %217 = vsyncadd [#allocation6], %s216
          %s218 = sshll.u32 [#allocation7], 4
          %s219 = int_to_ptr.vmem [resolvable:$true] %s218
          %224 = dma.hbm_to_vmem [thread:$0]  %s4, 512, %s219, [#allocation6], 128, 128, 8
        $region24: #{tpu_custom_call.1} parent=11 // pred_fallthru
          _
        // Predicated region
        $region25: #{tpu_custom_call.1} parent=11 // pred_check
          %p225 = pneg %p155
        $region26: #{tpu_custom_call.1} parent=11 // pred_check_branch
          %227 = sbr.rel (%p225) target = $region28
        $region27: #{tpu_custom_call.1} parent=11 // pred_region
          _
        $region28: #{tpu_custom_call.1} parent=11 // pred_fallthru
          _
      $region12: #{tpu_custom_call.1} parent=5 // pred_fallthru
        _
      %p228 = scmp.lt.s32.totalorder %s19, 2
      // Predicated region
      $region29: #{tpu_custom_call.1} parent=5 // pred_check
        %p229 = pneg %p228
      $region30: #{tpu_custom_call.1} parent=5 // pred_check_branch
        %231 = sbr.rel (%p229) target = $region32
      $region31: #{tpu_custom_call.1} parent=5 // pred_region
        // Predicated region
        $region33: #{tpu_custom_call.1} parent=31 // pred_check
          %p232 = pneg %p39
        $region34: #{tpu_custom_call.1} parent=31 // pred_check_branch
          %234 = sbr.rel (%p232) target = $region36
        $region35: #{tpu_custom_call.1} parent=31 // pred_region
          %s235 = sand.u32 %s29, 1
          %s236 = scalar_lea.sflag [#allocation3], %s235
          %s237 = sand.u32 %s29, 1
          %s238 = smul.addr %s237, 8
          %s239 = scalar_lea.vmem [#allocation2], %s238
          %s241 = ssub.s32 128, 128
          %242 = vsyncadd %s236, %s241
          %s243 = smul.addr %s19, 128
          %s244 = scalar_lea.hbm %s0, %s243
          %s246 = sshll.u32 %s239, 4
          %s247 = int_to_ptr.vmem [resolvable:$true] %s246
          %249 = dma.hbm_to_vmem [thread:$0]  %s244, 128, %s247, %s236
        $region36: #{tpu_custom_call.1} parent=31 // pred_fallthru
          _
        // Predicated region
        $region37: #{tpu_custom_call.1} parent=31 // pred_check
          %p250 = pneg %p65
        $region38: #{tpu_custom_call.1} parent=31 // pred_check_branch
          %252 = sbr.rel (%p250) target = $region40
        $region39: #{tpu_custom_call.1} parent=31 // pred_region
          %p253 = scmp.lt.s32.totalorder %s19, 1
          %s254 = scalar_select %p253, %s19, 1
          %s255 = scalar_lea.vmem %s1, %s254
        $region40: #{tpu_custom_call.1} parent=31 // pred_fallthru
          _
      $region32: #{tpu_custom_call.1} parent=5 // pred_fallthru
        _
      %p256 = scmp.le.s32.totalorder 1, %s19
      %p257 = scmp.lt.s32.totalorder %s19, 3
      %p258 = pnand %p256, %p257
      %p259 = pneg %p258
      // Predicated region
      $region41: #{tpu_custom_call.1} parent=5 // pred_check
        _
      $region42: #{tpu_custom_call.1} parent=5 // pred_check_branch
        %261 = sbr.rel (%p258) target = $region44
      $region43: #{tpu_custom_call.1} parent=5 // pred_region
        %s262 = ssub.s32 %s19, 1
        %s263 = sand.u32 %s32, 1
        %s264 = scalar_lea.sflag [#allocation3], %s263
        %s265 = sand.u32 %s32, 1
        %s266 = smul.addr %s265, 8
        %s267 = scalar_lea.vmem [#allocation2], %s266
        // Predicated region
        $region45: #{tpu_custom_call.1} parent=43 // pred_check
          %p268 = pneg %p45
        $region46: #{tpu_custom_call.1} parent=43 // pred_check_branch
          %270 = sbr.rel (%p268) target = $region48
        $region47: #{tpu_custom_call.1} parent=43 // pred_region
          %271 = dma.done %s264, 128
        $region48: #{tpu_custom_call.1} parent=43 // pred_fallthru
          _
        // Predicated region
        $region49: #{tpu_custom_call.1} parent=43 // pred_check
          %p272 = pneg %p92
        $region50: #{tpu_custom_call.1} parent=43 // pred_check_branch
          %274 = sbr.rel (%p272) target = $region52
        $region51: #{tpu_custom_call.1} parent=43 // pred_region
          %275 = dma.done [#allocation6], 512
        $region52: #{tpu_custom_call.1} parent=43 // pred_fallthru
          _
        // Predicated region
        $region53: #{tpu_custom_call.1} parent=43 // pred_check
          %p276 = pneg %p134
        $region54: #{tpu_custom_call.1} parent=43 // pred_check_branch
          %278 = sbr.rel (%p276) target = $region56
        $region55: #{tpu_custom_call.1} parent=43 // pred_region
          %279 = dma.done [#allocation6], 512
        $region56: #{tpu_custom_call.1} parent=43 // pred_fallthru
          _
        %s280 = sand.u32 %s32, 1
        %s281 = scalar_lea.sflag [#allocation3], %s280
        %s282 = sand.u32 %s32, 1
        %s283 = smul.addr %s282, 8
        %s284 = scalar_lea.vmem [#allocation2], %s283
        %p285 = pneg %p45
        %p286 = pneg %p42
        %p287 = scmp.lt.s32.totalorder %s24, 1
        %s288 = scalar_select %p287, %s24, 1
        %s289 = scalar_lea.vmem %s1, %s288
        %p290 = pneg %p71
        %p291 = pneg %p68
        %p292 = pneg %p92
        %p293 = pneg %p89
        %p294 = pneg %p113
        %p295 = pneg %p110
        %p296 = pneg %p134
        %p297 = pneg %p131
        %p298 = pneg %p155
        %p299 = pneg %p152
        %p300 = pneg %p181
        %p301 = pneg %p178
        %s302 = sand.u32 %s168, 1
        %s303 = scalar_lea.sflag [#allocation4], %s302
        %s304 = sand.u32 %s168, 1
        %s305 = smul.addr %s304, 8
        %s306 = scalar_lea.vmem [#allocation8], %s305
        %p307 = scmp.lt.s32.totalorder %s24, 1
        %s308 = scalar_select %p307, %s24, 1
        %s309 = scalar_lea.vmem %s1, %s308
        %v311 = vld [vmem:[%s267] sm:$0xff]
        %v312 = vld [vmem:[#allocation5] sm:$0xff]
        %v313 = vld [vmem:[#allocation5 + $0x8] sm:$0xff]
        %v314 = vld [vmem:[#allocation5 + $0x10] sm:$0xff]
        %v315 = vld [vmem:[#allocation5 + $0x18] sm:$0xff]
        %v316 = vpack.c.bf16 %v311, %v311
        %v317 = vpack.c.bf16 %v313, %v312
        %v318 = vpack.c.bf16 %v315, %v314
        %v319 = vld [vmem:[%s3] sm:$0x1]
        %v321 = vlaneseq
        %v322 = vshrl.u32 %v321, 7
        %v323 = vsub.s32 0, %v322
        %v324 = vrot.slane %v319, %v323
        %vm326 = vcmask 261120
        %v328 = vsel %vm326, %v316, 0
        %330 = vmatprep.subr.bf16.mxu0 0
        %331 = vmatpush1.bf16.msra.mxu0 %v317
        %332 = vmatprep.subr.bf16.mxu0 0
        %333 = vmatpush1.bf16.msra.mxu0 %v318
        %334 = vmatprep.subr.bf16.mxu0 0
        %335 = vmatpush1.bf16.msra.mxu0 0
        %336 = vmatprep.subr.bf16.mxu0 0
        %337 = vmatpush1.bf16.msra.mxu0 0
        %338 = vmatprep.subr.bf16.mxu0 0
        %339 = vmatpush1.bf16.msra.mxu0 0
        %340 = vmatprep.subr.bf16.mxu0 0
        %341 = vmatpush1.bf16.msra.mxu0 0
        %342 = vmatprep.subr.bf16.mxu0 0
        %343 = vmatpush1.bf16.msra.mxu0 0
        %344 = vmatprep.subr.bf16.mxu0 0
        %345 = vmatpush1.bf16.msra.mxu0 0
        %346 = vmatprep.subr.bf16.mxu0 0
        %347 = vmatpush1.bf16.msra.mxu0 0
        %348 = vmatprep.subr.bf16.mxu0 0
        %349 = vmatpush1.bf16.msra.mxu0 0
        %350 = vmatprep.subr.bf16.mxu0 0
        %351 = vmatpush1.bf16.msra.mxu0 0
        %352 = vmatprep.subr.bf16.mxu0 0
        %353 = vmatpush1.bf16.msra.mxu0 0
        %354 = vmatprep.subr.bf16.mxu0 0
        %355 = vmatpush1.bf16.msra.mxu0 0
        %356 = vmatprep.subr.bf16.mxu0 0
        %357 = vmatpush1.bf16.msra.mxu0 0
        %358 = vmatprep.subr.bf16.mxu0 0
        %359 = vmatpush1.bf16.msra.mxu0 0
        %360 = vmatprep.subr.bf16.mxu0 0
        %361 = vmatpush1.bf16.msra.mxu0 0
        %362 = vmatprep.mubr.bf16.mxu0 0
        %363 = vmatmul.mubr.bf16.gmra.mrb[0].mxu0 %v328
        %v364 = vpop.f32.mrb[0].mxu0
        %v365 = vadd.f32 %v324, %v364
        %v366 = vpop.f32.mrb[0].mxu0
        %v367 = vpop.f32.mrb[0].mxu0
        %v368 = vpop.f32.mrb[0].mxu0
        %369 = vdwg.mxu0
        %v370 = vld [vmem:[%s309] sm:$0x1]
        %v371 = vld [vmem:[#allocation7] sm:$0xff]
        %v372 = vld [vmem:[#allocation7 + $0x8] sm:$0xff]
        %v373 = vld [vmem:[#allocation7 + $0x10] sm:$0xff]
        %v374 = vld [vmem:[#allocation7 + $0x18] sm:$0xff]
        %vm375 = vcmp.eq.f32.partialorder %v370, 0.0
        %v376 = vsel %vm375, -1e+09, 0.0
        %v377 = vpack.c.bf16 %v365, %v365
        %v379 = vlaneseq
        %v380 = vshrl.u32 %v379, 7
        %v381 = vsub.s32 0, %v380
        %v382 = vrot.slane %v376, %v381
        %385 = vrot.lane.b32.xlu0 %v377, 96
        %v386 = vpop.permute.xlu0 %385
        %vm387 = vcmask 64512
        %v389 = vsel %vm387, %v377, 0
        %v392 = vsel %vm387, %v386, 0
        %394 = vmatprep.subr.bf16.mxu0 0
        %395 = vmatpush1.bf16.xpose.msra.mxu0 %v392
        %396 = vmatprep.subr.bf16.mxu0 0
        %397 = vmatpush1.bf16.xpose.msra.mxu0 0
        %398 = vmatprep.subr.bf16.mxu0 0
        %399 = vmatpush1.bf16.xpose.msra.mxu0 0
        %400 = vmatprep.subr.bf16.mxu0 0
        %401 = vmatpush1.bf16.xpose.msra.mxu0 0
        %402 = vmatprep.subr.bf16.mxu0 0
        %403 = vmatpush1.bf16.xpose.msra.mxu0 0
        %404 = vmatprep.subr.bf16.mxu0 0
        %405 = vmatpush1.bf16.xpose.msra.mxu0 0
        %406 = vmatprep.subr.bf16.mxu0 0
        %407 = vmatpush1.bf16.xpose.msra.mxu0 0
        %408 = vmatprep.subr.bf16.mxu0 0
        %409 = vmatpush1.bf16.xpose.msra.mxu0 0
        %410 = vmatprep.subr.bf16.mxu0 0
        %411 = vmatpush1.bf16.xpose.msra.mxu0 0
        %412 = vmatprep.subr.bf16.mxu0 0
        %413 = vmatpush1.bf16.xpose.msra.mxu0 0
        %414 = vmatprep.subr.bf16.mxu0 0
        %415 = vmatpush1.bf16.xpose.msra.mxu0 0
        %416 = vmatprep.subr.bf16.mxu0 0
        %417 = vmatpush1.bf16.xpose.msra.mxu0 0
        %418 = vmatprep.subr.bf16.mxu0 0
        %419 = vmatpush1.bf16.xpose.msra.mxu0 0
        %420 = vmatprep.subr.bf16.mxu0 0
        %421 = vmatpush1.bf16.xpose.msra.mxu0 0
        %422 = vmatprep.subr.bf16.mxu0 0
        %423 = vmatpush1.bf16.xpose.msra.mxu0 0
        %424 = vmatprep.subr.bf16.mxu0 0
        %425 = vmatpush1.bf16.xpose.msra.mxu0 0
        %426 = vmatprep.mubr.bf16.mxu0 0
        %427 = vmatmul.mubr.bf16.gmra.mrb[0].mxu0 %v389
        %v428 = vpop.f32.mrb[0].mxu0
        %v429 = vadd.f32 %v382, %v428
        %v430 = vpop.f32.mrb[0].mxu0
        %v431 = vpop.f32.mrb[0].mxu0
        %v432 = vpop.f32.mrb[0].mxu0
        %433 = vdwg.mxu0
        %v434 = vsel %vm387, %v429, -inf
        %435 = vmax.xlane.f32.xlu0 %v434
        %v436 = vpop.xlane.xlu0 %435
        %v437 = vsub.f32 %v429, %v436
        %v438 = vmul.f32 %v437, 1.442695
        %v439 = vpow.pop %v438
        %v440 = vsel %vm387, %v439, 0.0
        %441 = vadd.xlane.f32.xlu0 %v440
        %v442 = vpop.xlane.xlu0 %441
        %v443 = vrcp.pop %v442
        %v444 = vmul.f32 %v439, %v443
        %v445 = vpack.c.bf16 %v444, %v444
        %446 = vrot.lane.b32.xlu0 %v377, 64
        %v447 = vpop.permute.xlu0 %446
        %v449 = vsel %vm387, %v445, 0
        %vm451 = vcmask 1043456
        %v453 = vsel %vm451, %v447, 0
        %455 = vmatprep.subr.bf16.mxu0 0
        %456 = vmatpush1.bf16.msra.mxu0 %v453
        %457 = vmatprep.subr.bf16.mxu0 0
        %458 = vmatpush1.bf16.msra.mxu0 0
        %459 = vmatprep.subr.bf16.mxu0 0
        %460 = vmatpush1.bf16.msra.mxu0 0
        %461 = vmatprep.subr.bf16.mxu0 0
        %462 = vmatpush1.bf16.msra.mxu0 0
        %463 = vmatprep.subr.bf16.mxu0 0
        %464 = vmatpush1.bf16.msra.mxu0 0
        %465 = vmatprep.subr.bf16.mxu0 0
        %466 = vmatpush1.bf16.msra.mxu0 0
        %467 = vmatprep.subr.bf16.mxu0 0
        %468 = vmatpush1.bf16.msra.mxu0 0
        %469 = vmatprep.subr.bf16.mxu0 0
        %470 = vmatpush1.bf16.msra.mxu0 0
        %471 = vmatprep.subr.bf16.mxu0 0
        %472 = vmatpush1.bf16.msra.mxu0 0
        %473 = vmatprep.subr.bf16.mxu0 0
        %474 = vmatpush1.bf16.msra.mxu0 0
        %475 = vmatprep.subr.bf16.mxu0 0
        %476 = vmatpush1.bf16.msra.mxu0 0
        %477 = vmatprep.subr.bf16.mxu0 0
        %478 = vmatpush1.bf16.msra.mxu0 0
        %479 = vmatprep.subr.bf16.mxu0 0
        %480 = vmatpush1.bf16.msra.mxu0 0
        %481 = vmatprep.subr.bf16.mxu0 0
        %482 = vmatpush1.bf16.msra.mxu0 0
        %483 = vmatprep.subr.bf16.mxu0 0
        %484 = vmatpush1.bf16.msra.mxu0 0
        %485 = vmatprep.subr.bf16.mxu0 0
        %486 = vmatpush1.bf16.msra.mxu0 0
        %487 = vmatprep.mubr.bf16.mxu0 0
        %488 = vmatmul.mubr.bf16.gmra.mrb[0].mxu0 %v449
        %v489 = vpop.f32.mrb[0].mxu0
        %v490 = vadd.f32 0.0, %v489
        %v491 = vpop.f32.mrb[0].mxu0
        %v492 = vpop.f32.mrb[0].mxu0
        %v493 = vpop.f32.mrb[0].mxu0
        %494 = vdwg.mxu0
        %v495 = vpack.c.bf16 %v490, %v490
        %v496 = vpack.c.bf16 %v371, %v371
        %497 = vrot.lane.b32.xlu0 %v377, 120
        %v498 = vpop.permute.xlu0 %497
        %499 = vrot.lane.b32.xlu0 %v377, 88
        %v500 = vpop.permute.xlu0 %499
        %v502 = vsel %vm387, %v498, 0
        %v505 = vsel %vm387, %v500, 0
        %507 = vmatprep.subr.bf16.mxu0 0
        %508 = vmatpush1.bf16.xpose.msra.mxu0 %v505
        %509 = vmatprep.subr.bf16.mxu0 0
        %510 = vmatpush1.bf16.xpose.msra.mxu0 0
        %511 = vmatprep.subr.bf16.mxu0 0
        %512 = vmatpush1.bf16.xpose.msra.mxu0 0
        %513 = vmatprep.subr.bf16.mxu0 0
        %514 = vmatpush1.bf16.xpose.msra.mxu0 0
        %515 = vmatprep.subr.bf16.mxu0 0
        %516 = vmatpush1.bf16.xpose.msra.mxu0 0
        %517 = vmatprep.subr.bf16.mxu0 0
        %518 = vmatpush1.bf16.xpose.msra.mxu0 0
        %519 = vmatprep.subr.bf16.mxu0 0
        %520 = vmatpush1.bf16.xpose.msra.mxu0 0
        %521 = vmatprep.subr.bf16.mxu0 0
        %522 = vmatpush1.bf16.xpose.msra.mxu0 0
        %523 = vmatprep.subr.bf16.mxu0 0
        %524 = vmatpush1.bf16.xpose.msra.mxu0 0
        %525 = vmatprep.subr.bf16.mxu0 0
        %526 = vmatpush1.bf16.xpose.msra.mxu0 0
        %527 = vmatprep.subr.bf16.mxu0 0
        %528 = vmatpush1.bf16.xpose.msra.mxu0 0
        %529 = vmatprep.subr.bf16.mxu0 0
        %530 = vmatpush1.bf16.xpose.msra.mxu0 0
        %531 = vmatprep.subr.bf16.mxu0 0
        %532 = vmatpush1.bf16.xpose.msra.mxu0 0
        %533 = vmatprep.subr.bf16.mxu0 0
        %534 = vmatpush1.bf16.xpose.msra.mxu0 0
        %535 = vmatprep.subr.bf16.mxu0 0
        %536 = vmatpush1.bf16.xpose.msra.mxu0 0
        %537 = vmatprep.subr.bf16.mxu0 0
        %538 = vmatpush1.bf16.xpose.msra.mxu0 0
        %539 = vmatprep.mubr.bf16.mxu0 0
        %540 = vmatmul.mubr.bf16.gmra.mrb[0].mxu0 %v502
        %v541 = vpop.f32.mrb[0].mxu0
        %v542 = vadd.f32 %v382, %v541
        %v543 = vpop.f32.mrb[0].mxu0
        %v544 = vpop.f32.mrb[0].mxu0
        %v545 = vpop.f32.mrb[0].mxu0
        %546 = vdwg.mxu0
        %v547 = vsel %vm387, %v542, -inf
        %548 = vmax.xlane.f32.xlu0 %v547
        %v549 = vpop.xlane.xlu0 %548
        %v550 = vsub.f32 %v542, %v549
        %v551 = vmul.f32 %v550, 1.442695
        %v552 = vpow.pop %v551
        %v553 = vsel %vm387, %v552, 0.0
        %554 = vadd.xlane.f32.xlu0 %v553
        %v555 = vpop.xlane.xlu0 %554
        %v556 = vrcp.pop %v555
        %v557 = vmul.f32 %v552, %v556
        %v558 = vpack.c.bf16 %v557, %v557
        %559 = vrot.lane.b32.xlu0 %v377, 56
        %v560 = vpop.permute.xlu0 %559
        %v562 = vsel %vm387, %v558, 0
        %v565 = vsel %vm451, %v560, 0
        %567 = vmatprep.subr.bf16.mxu0 0
        %568 = vmatpush1.bf16.msra.mxu0 %v565
        %569 = vmatprep.subr.bf16.mxu0 0
        %570 = vmatpush1.bf16.msra.mxu0 0
        %571 = vmatprep.subr.bf16.mxu0 0
        %572 = vmatpush1.bf16.msra.mxu0 0
        %573 = vmatprep.subr.bf16.mxu0 0
        %574 = vmatpush1.bf16.msra.mxu0 0
        %575 = vmatprep.subr.bf16.mxu0 0
        %576 = vmatpush1.bf16.msra.mxu0 0
        %577 = vmatprep.subr.bf16.mxu0 0
        %578 = vmatpush1.bf16.msra.mxu0 0
        %579 = vmatprep.subr.bf16.mxu0 0
        %580 = vmatpush1.bf16.msra.mxu0 0
        %581 = vmatprep.subr.bf16.mxu0 0
        %582 = vmatpush1.bf16.msra.mxu0 0
        %583 = vmatprep.subr.bf16.mxu0 0
        %584 = vmatpush1.bf16.msra.mxu0 0
        %585 = vmatprep.subr.bf16.mxu0 0
        %586 = vmatpush1.bf16.msra.mxu0 0
        %587 = vmatprep.subr.bf16.mxu0 0
        %588 = vmatpush1.bf16.msra.mxu0 0
        %589 = vmatprep.subr.bf16.mxu0 0
        %590 = vmatpush1.bf16.msra.mxu0 0
        %591 = vmatprep.subr.bf16.mxu0 0
        %592 = vmatpush1.bf16.msra.mxu0 0
        %593 = vmatprep.subr.bf16.mxu0 0
        %594 = vmatpush1.bf16.msra.mxu0 0
        %595 = vmatprep.subr.bf16.mxu0 0
        %596 = vmatpush1.bf16.msra.mxu0 0
        %597 = vmatprep.subr.bf16.mxu0 0
        %598 = vmatpush1.bf16.msra.mxu0 0
        %599 = vmatprep.mubr.bf16.mxu0 0
        %600 = vmatmul.mubr.bf16.gmra.mrb[0].mxu0 %v562
        %v601 = vpop.f32.mrb[0].mxu0
        %v602 = vadd.f32 0.0, %v601
        %v603 = vpop.f32.mrb[0].mxu0
        %v604 = vpop.f32.mrb[0].mxu0
        %v605 = vpop.f32.mrb[0].mxu0
        %606 = vdwg.mxu0
        %v607 = vpack.c.bf16 %v602, %v602
        %v608 = vpack.c.bf16 %v372, %v372
        %v610 = vsel %vm387, %v607, 0
        %v613 = vsel %vm451, %v608, 0
        %615 = vmatprep.subr.bf16.mxu0 0
        %616 = vmatpush1.bf16.msra.mxu0 %v613
        %617 = vmatprep.subr.bf16.mxu0 0
        %618 = vmatpush1.bf16.msra.mxu0 0
        %619 = vmatprep.subr.bf16.mxu0 0
        %620 = vmatpush1.bf16.msra.mxu0 0
        %621 = vmatprep.subr.bf16.mxu0 0
        %622 = vmatpush1.bf16.msra.mxu0 0
        %623 = vmatprep.subr.bf16.mxu0 0
        %624 = vmatpush1.bf16.msra.mxu0 0
        %625 = vmatprep.subr.bf16.mxu0 0
        %626 = vmatpush1.bf16.msra.mxu0 0
        %627 = vmatprep.subr.bf16.mxu0 0
        %628 = vmatpush1.bf16.msra.mxu0 0
        %629 = vmatprep.subr.bf16.mxu0 0
        %630 = vmatpush1.bf16.msra.mxu0 0
        %631 = vmatprep.subr.bf16.mxu0 0
        %632 = vmatpush1.bf16.msra.mxu0 0
        %633 = vmatprep.subr.bf16.mxu0 0
        %634 = vmatpush1.bf16.msra.mxu0 0
        %635 = vmatprep.subr.bf16.mxu0 0
        %636 = vmatpush1.bf16.msra.mxu0 0
        %637 = vmatprep.subr.bf16.mxu0 0
        %638 = vmatpush1.bf16.msra.mxu0 0
        %639 = vmatprep.subr.bf16.mxu0 0
        %640 = vmatpush1.bf16.msra.mxu0 0
        %641 = vmatprep.subr.bf16.mxu0 0
        %642 = vmatpush1.bf16.msra.mxu0 0
        %643 = vmatprep.subr.bf16.mxu0 0
        %644 = vmatpush1.bf16.msra.mxu0 0
        %645 = vmatprep.subr.bf16.mxu0 0
        %646 = vmatpush1.bf16.msra.mxu0 0
        %647 = vmatprep.mubr.bf16.mxu0 0
        %648 = vmatmul.mubr.bf16.gmra.mrb[0].mxu0 %v610
        %v649 = vpop.f32.mrb[0].mxu0
        %v650 = vadd.f32 0.0, %v649
        %v651 = vpop.f32.mrb[0].mxu0
        %v652 = vpop.f32.mrb[0].mxu0
        %v653 = vpop.f32.mrb[0].mxu0
        %654 = vdwg.mxu0
        %v656 = vsel %vm387, %v495, 0
        %v659 = vsel %vm451, %v496, 0
        %661 = vmatprep.subr.bf16.mxu0 0
        %662 = vmatpush1.bf16.msra.mxu0 %v659
        %663 = vmatprep.subr.bf16.mxu0 0
        %664 = vmatpush1.bf16.msra.mxu0 0
        %665 = vmatprep.subr.bf16.mxu0 0
        %666 = vmatpush1.bf16.msra.mxu0 0
        %667 = vmatprep.subr.bf16.mxu0 0
        %668 = vmatpush1.bf16.msra.mxu0 0
        %669 = vmatprep.subr.bf16.mxu0 0
        %670 = vmatpush1.bf16.msra.mxu0 0
        %671 = vmatprep.subr.bf16.mxu0 0
        %672 = vmatpush1.bf16.msra.mxu0 0
        %673 = vmatprep.subr.bf16.mxu0 0
        %674 = vmatpush1.bf16.msra.mxu0 0
        %675 = vmatprep.subr.bf16.mxu0 0
        %676 = vmatpush1.bf16.msra.mxu0 0
        %677 = vmatprep.subr.bf16.mxu0 0
        %678 = vmatpush1.bf16.msra.mxu0 0
        %679 = vmatprep.subr.bf16.mxu0 0
        %680 = vmatpush1.bf16.msra.mxu0 0
        %681 = vmatprep.subr.bf16.mxu0 0
        %682 = vmatpush1.bf16.msra.mxu0 0
        %683 = vmatprep.subr.bf16.mxu0 0
        %684 = vmatpush1.bf16.msra.mxu0 0
        %685 = vmatprep.subr.bf16.mxu0 0
        %686 = vmatpush1.bf16.msra.mxu0 0
        %687 = vmatprep.subr.bf16.mxu0 0
        %688 = vmatpush1.bf16.msra.mxu0 0
        %689 = vmatprep.subr.bf16.mxu0 0
        %690 = vmatpush1.bf16.msra.mxu0 0
        %691 = vmatprep.subr.bf16.mxu0 0
        %692 = vmatpush1.bf16.msra.mxu0 0
        %693 = vmatprep.mubr.bf16.mxu0 0
        %694 = vmatmul.mubr.bf16.gmra.mrb[0].mxu0 %v656
        %v695 = vpop.f32.mrb[0].mxu0
        %v696 = vadd.f32 %v650, %v695
        %v697 = vpop.f32.mrb[0].mxu0
        %v698 = vpop.f32.mrb[0].mxu0
        %v699 = vpop.f32.mrb[0].mxu0
        %700 = vdwg.mxu0
        %701 = vrot.lane.b32.xlu0 %v377, 112
        %v702 = vpop.permute.xlu0 %701
        %703 = vrot.lane.b32.xlu0 %v377, 80
        %v704 = vpop.permute.xlu0 %703
        %v706 = vsel %vm387, %v702, 0
        %v709 = vsel %vm387, %v704, 0
        %711 = vmatprep.subr.bf16.mxu0 0
        %712 = vmatpush1.bf16.xpose.msra.mxu0 %v709
        %713 = vmatprep.subr.bf16.mxu0 0
        %714 = vmatpush1.bf16.xpose.msra.mxu0 0
        %715 = vmatprep.subr.bf16.mxu0 0
        %716 = vmatpush1.bf16.xpose.msra.mxu0 0
        %717 = vmatprep.subr.bf16.mxu0 0
        %718 = vmatpush1.bf16.xpose.msra.mxu0 0
        %719 = vmatprep.subr.bf16.mxu0 0
        %720 = vmatpush1.bf16.xpose.msra.mxu0 0
        %721 = vmatprep.subr.bf16.mxu0 0
        %722 = vmatpush1.bf16.xpose.msra.mxu0 0
        %723 = vmatprep.subr.bf16.mxu0 0
        %724 = vmatpush1.bf16.xpose.msra.mxu0 0
        %725 = vmatprep.subr.bf16.mxu0 0
        %726 = vmatpush1.bf16.xpose.msra.mxu0 0
        %727 = vmatprep.subr.bf16.mxu0 0
        %728 = vmatpush1.bf16.xpose.msra.mxu0 0
        %729 = vmatprep.subr.bf16.mxu0 0
        %730 = vmatpush1.bf16.xpose.msra.mxu0 0
        %731 = vmatprep.subr.bf16.mxu0 0
        %732 = vmatpush1.bf16.xpose.msra.mxu0 0
        %733 = vmatprep.subr.bf16.mxu0 0
        %734 = vmatpush1.bf16.xpose.msra.mxu0 0
        %735 = vmatprep.subr.bf16.mxu0 0
        %736 = vmatpush1.bf16.xpose.msra.mxu0 0
        %737 = vmatprep.subr.bf16.mxu0 0
        %738 = vmatpush1.bf16.xpose.msra.mxu0 0
        %739 = vmatprep.subr.bf16.mxu0 0
        %740 = vmatpush1.bf16.xpose.msra.mxu0 0
        %741 = vmatprep.subr.bf16.mxu0 0
        %742 = vmatpush1.bf16.xpose.msra.mxu0 0
        %743 = vmatprep.mubr.bf16.mxu0 0
        %744 = vmatmul.mubr.bf16.gmra.mrb[0].mxu0 %v706
        %v745 = vpop.f32.mrb[0].mxu0
        %v746 = vadd.f32 %v382, %v745
        %v747 = vpop.f32.mrb[0].mxu0
        %v748 = vpop.f32.mrb[0].mxu0
        %v749 = vpop.f32.mrb[0].mxu0
        %750 = vdwg.mxu0
        %v751 = vsel %vm387, %v746, -inf
        %752 = vmax.xlane.f32.xlu0 %v751
        %v753 = vpop.xlane.xlu0 %752
        %v754 = vsub.f32 %v746, %v753
        %v755 = vmul.f32 %v754, 1.442695
        %v756 = vpow.pop %v755
        %v757 = vsel %vm387, %v756, 0.0
        %758 = vadd.xlane.f32.xlu0 %v757
        %v759 = vpop.xlane.xlu0 %758
        %v760 = vrcp.pop %v759
        %v761 = vmul.f32 %v756, %v760
        %v762 = vpack.c.bf16 %v761, %v761
        %763 = vrot.lane.b32.xlu0 %v377, 48
        %v764 = vpop.permute.xlu0 %763
        %v766 = vsel %vm387, %v762, 0
        %v769 = vsel %vm451, %v764, 0
        %771 = vmatprep.subr.bf16.mxu0 0
        %772 = vmatpush1.bf16.msra.mxu0 %v769
        %773 = vmatprep.subr.bf16.mxu0 0
        %774 = vmatpush1.bf16.msra.mxu0 0
        %775 = vmatprep.subr.bf16.mxu0 0
        %776 = vmatpush1.bf16.msra.mxu0 0
        %777 = vmatprep.subr.bf16.mxu0 0
        %778 = vmatpush1.bf16.msra.mxu0 0
        %779 = vmatprep.subr.bf16.mxu0 0
        %780 = vmatpush1.bf16.msra.mxu0 0
        %781 = vmatprep.subr.bf16.mxu0 0
        %782 = vmatpush1.bf16.msra.mxu0 0
        %783 = vmatprep.subr.bf16.mxu0 0
        %784 = vmatpush1.bf16.msra.mxu0 0
        %785 = vmatprep.subr.bf16.mxu0 0
        %786 = vmatpush1.bf16.msra.mxu0 0
        %787 = vmatprep.subr.bf16.mxu0 0
        %788 = vmatpush1.bf16.msra.mxu0 0
        %789 = vmatprep.subr.bf16.mxu0 0
        %790 = vmatpush1.bf16.msra.mxu0 0
        %791 = vmatprep.subr.bf16.mxu0 0
        %792 = vmatpush1.bf16.msra.mxu0 0
        %793 = vmatprep.subr.bf16.mxu0 0
        %794 = vmatpush1.bf16.msra.mxu0 0
        %795 = vmatprep.subr.bf16.mxu0 0
        %796 = vmatpush1.bf16.msra.mxu0 0
        %797 = vmatprep.subr.bf16.mxu0 0
        %798 = vmatpush1.bf16.msra.mxu0 0
        %799 = vmatprep.subr.bf16.mxu0 0
        %800 = vmatpush1.bf16.msra.mxu0 0
        %801 = vmatprep.subr.bf16.mxu0 0
        %802 = vmatpush1.bf16.msra.mxu0 0
        %803 = vmatprep.mubr.bf16.mxu0 0
        %804 = vmatmul.mubr.bf16.gmra.mrb[0].mxu0 %v766
        %v805 = vpop.f32.mrb[0].mxu0
        %v806 = vadd.f32 0.0, %v805
        %v807 = vpop.f32.mrb[0].mxu0
        %v808 = vpop.f32.mrb[0].mxu0
        %v809 = vpop.f32.mrb[0].mxu0
        %810 = vdwg.mxu0
        %v811 = vpack.c.bf16 %v806, %v806
        %v812 = vpack.c.bf16 %v373, %v373
        %v814 = vsel %vm387, %v811, 0
        %v817 = vsel %vm451, %v812, 0
        %819 = vmatprep.subr.bf16.mxu0 0
        %820 = vmatpush1.bf16.msra.mxu0 %v817
        %821 = vmatprep.subr.bf16.mxu0 0
        %822 = vmatpush1.bf16.msra.mxu0 0
        %823 = vmatprep.subr.bf16.mxu0 0
        %824 = vmatpush1.bf16.msra.mxu0 0
        %825 = vmatprep.subr.bf16.mxu0 0
        %826 = vmatpush1.bf16.msra.mxu0 0
        %827 = vmatprep.subr.bf16.mxu0 0
        %828 = vmatpush1.bf16.msra.mxu0 0
        %829 = vmatprep.subr.bf16.mxu0 0
        %830 = vmatpush1.bf16.msra.mxu0 0
        %831 = vmatprep.subr.bf16.mxu0 0
        %832 = vmatpush1.bf16.msra.mxu0 0
        %833 = vmatprep.subr.bf16.mxu0 0
        %834 = vmatpush1.bf16.msra.mxu0 0
        %835 = vmatprep.subr.bf16.mxu0 0
        %836 = vmatpush1.bf16.msra.mxu0 0
        %837 = vmatprep.subr.bf16.mxu0 0
        %838 = vmatpush1.bf16.msra.mxu0 0
        %839 = vmatprep.subr.bf16.mxu0 0
        %840 = vmatpush1.bf16.msra.mxu0 0
        %841 = vmatprep.subr.bf16.mxu0 0
        %842 = vmatpush1.bf16.msra.mxu0 0
        %843 = vmatprep.subr.bf16.mxu0 0
        %844 = vmatpush1.bf16.msra.mxu0 0
        %845 = vmatprep.subr.bf16.mxu0 0
        %846 = vmatpush1.bf16.msra.mxu0 0
        %847 = vmatprep.subr.bf16.mxu0 0
        %848 = vmatpush1.bf16.msra.mxu0 0
        %849 = vmatprep.subr.bf16.mxu0 0
        %850 = vmatpush1.bf16.msra.mxu0 0
        %851 = vmatprep.mubr.bf16.mxu0 0
        %852 = vmatmul.mubr.bf16.gmra.mrb[0].mxu0 %v814
        %v853 = vpop.f32.mrb[0].mxu0
        %v854 = vadd.f32 0.0, %v853
        %v855 = vpop.f32.mrb[0].mxu0
        %v856 = vpop.f32.mrb[0].mxu0
        %v857 = vpop.f32.mrb[0].mxu0
        %858 = vdwg.mxu0
        %v859 = vadd.f32 %v696, %v854
        %860 = vrot.lane.b32.xlu0 %v377, 104
        %v861 = vpop.permute.xlu0 %860
        %862 = vrot.lane.b32.xlu0 %v377, 72
        %v863 = vpop.permute.xlu0 %862
        %v865 = vsel %vm387, %v861, 0
        %v868 = vsel %vm387, %v863, 0
        %870 = vmatprep.subr.bf16.mxu0 0
        %871 = vmatpush1.bf16.xpose.msra.mxu0 %v868
        %872 = vmatprep.subr.bf16.mxu0 0
        %873 = vmatpush1.bf16.xpose.msra.mxu0 0
        %874 = vmatprep.subr.bf16.mxu0 0
        %875 = vmatpush1.bf16.xpose.msra.mxu0 0
        %876 = vmatprep.subr.bf16.mxu0 0
        %877 = vmatpush1.bf16.xpose.msra.mxu0 0
        %878 = vmatprep.subr.bf16.mxu0 0
        %879 = vmatpush1.bf16.xpose.msra.mxu0 0
        %880 = vmatprep.subr.bf16.mxu0 0
        %881 = vmatpush1.bf16.xpose.msra.mxu0 0
        %882 = vmatprep.subr.bf16.mxu0 0
        %883 = vmatpush1.bf16.xpose.msra.mxu0 0
        %884 = vmatprep.subr.bf16.mxu0 0
        %885 = vmatpush1.bf16.xpose.msra.mxu0 0
        %886 = vmatprep.subr.bf16.mxu0 0
        %887 = vmatpush1.bf16.xpose.msra.mxu0 0
        %888 = vmatprep.subr.bf16.mxu0 0
        %889 = vmatpush1.bf16.xpose.msra.mxu0 0
        %890 = vmatprep.subr.bf16.mxu0 0
        %891 = vmatpush1.bf16.xpose.msra.mxu0 0
        %892 = vmatprep.subr.bf16.mxu0 0
        %893 = vmatpush1.bf16.xpose.msra.mxu0 0
        %894 = vmatprep.subr.bf16.mxu0 0
        %895 = vmatpush1.bf16.xpose.msra.mxu0 0
        %896 = vmatprep.subr.bf16.mxu0 0
        %897 = vmatpush1.bf16.xpose.msra.mxu0 0
        %898 = vmatprep.subr.bf16.mxu0 0
        %899 = vmatpush1.bf16.xpose.msra.mxu0 0
        %900 = vmatprep.subr.bf16.mxu0 0
        %901 = vmatpush1.bf16.xpose.msra.mxu0 0
        %902 = vmatprep.mubr.bf16.mxu0 0
        %903 = vmatmul.mubr.bf16.gmra.mrb[0].mxu0 %v865
        %v904 = vpop.f32.mrb[0].mxu0
        %v905 = vadd.f32 %v382, %v904
        %v906 = vpop.f32.mrb[0].mxu0
        %v907 = vpop.f32.mrb[0].mxu0
        %v908 = vpop.f32.mrb[0].mxu0
        %909 = vdwg.mxu0
        %v910 = vsel %vm387, %v905, -inf
        %911 = vmax.xlane.f32.xlu0 %v910
        %v912 = vpop.xlane.xlu0 %911
        %v913 = vsub.f32 %v905, %v912
        %v914 = vmul.f32 %v913, 1.442695
        %v915 = vpow.pop %v914
        %v916 = vsel %vm387, %v915, 0.0
        %917 = vadd.xlane.f32.xlu0 %v916
        %v918 = vpop.xlane.xlu0 %917
        %v919 = vrcp.pop %v918
        %v920 = vmul.f32 %v915, %v919
        %v921 = vpack.c.bf16 %v920, %v920
        %922 = vrot.lane.b32.xlu0 %v377, 40
        %v923 = vpop.permute.xlu0 %922
        %v925 = vsel %vm387, %v921, 0
        %v928 = vsel %vm451, %v923, 0
        %930 = vmatprep.subr.bf16.mxu0 0
        %931 = vmatpush1.bf16.msra.mxu0 %v928
        %932 = vmatprep.subr.bf16.mxu0 0
        %933 = vmatpush1.bf16.msra.mxu0 0
        %934 = vmatprep.subr.bf16.mxu0 0
        %935 = vmatpush1.bf16.msra.mxu0 0
        %936 = vmatprep.subr.bf16.mxu0 0
        %937 = vmatpush1.bf16.msra.mxu0 0
        %938 = vmatprep.subr.bf16.mxu0 0
        %939 = vmatpush1.bf16.msra.mxu0 0
        %940 = vmatprep.subr.bf16.mxu0 0
        %941 = vmatpush1.bf16.msra.mxu0 0
        %942 = vmatprep.subr.bf16.mxu0 0
        %943 = vmatpush1.bf16.msra.mxu0 0
        %944 = vmatprep.subr.bf16.mxu0 0
        %945 = vmatpush1.bf16.msra.mxu0 0
        %946 = vmatprep.subr.bf16.mxu0 0
        %947 = vmatpush1.bf16.msra.mxu0 0
        %948 = vmatprep.subr.bf16.mxu0 0
        %949 = vmatpush1.bf16.msra.mxu0 0
        %950 = vmatprep.subr.bf16.mxu0 0
        %951 = vmatpush1.bf16.msra.mxu0 0
        %952 = vmatprep.subr.bf16.mxu0 0
        %953 = vmatpush1.bf16.msra.mxu0 0
        %954 = vmatprep.subr.bf16.mxu0 0
        %955 = vmatpush1.bf16.msra.mxu0 0
        %956 = vmatprep.subr.bf16.mxu0 0
        %957 = vmatpush1.bf16.msra.mxu0 0
        %958 = vmatprep.subr.bf16.mxu0 0
        %959 = vmatpush1.bf16.msra.mxu0 0
        %960 = vmatprep.subr.bf16.mxu0 0
        %961 = vmatpush1.bf16.msra.mxu0 0
        %962 = vmatprep.mubr.bf16.mxu0 0
        %963 = vmatmul.mubr.bf16.gmra.mrb[0].mxu0 %v925
        %v964 = vpop.f32.mrb[0].mxu0
        %v965 = vadd.f32 0.0, %v964
        %v966 = vpop.f32.mrb[0].mxu0
        %v967 = vpop.f32.mrb[0].mxu0
        %v968 = vpop.f32.mrb[0].mxu0
        %969 = vdwg.mxu0
        %v970 = vpack.c.bf16 %v965, %v965
        %v971 = vpack.c.bf16 %v374, %v374
        %v973 = vsel %vm387, %v970, 0
        %v976 = vsel %vm451, %v971, 0
        %978 = vmatprep.subr.bf16.mxu0 0
        %979 = vmatpush1.bf16.msra.mxu0 %v976
        %980 = vmatprep.subr.bf16.mxu0 0
        %981 = vmatpush1.bf16.msra.mxu0 0
        %982 = vmatprep.subr.bf16.mxu0 0
        %983 = vmatpush1.bf16.msra.mxu0 0
        %984 = vmatprep.subr.bf16.mxu0 0
        %985 = vmatpush1.bf16.msra.mxu0 0
        %986 = vmatprep.subr.bf16.mxu0 0
        %987 = vmatpush1.bf16.msra.mxu0 0
        %988 = vmatprep.subr.bf16.mxu0 0
        %989 = vmatpush1.bf16.msra.mxu0 0
        %990 = vmatprep.subr.bf16.mxu0 0
        %991 = vmatpush1.bf16.msra.mxu0 0
        %992 = vmatprep.subr.bf16.mxu0 0
        %993 = vmatpush1.bf16.msra.mxu0 0
        %994 = vmatprep.subr.bf16.mxu0 0
        %995 = vmatpush1.bf16.msra.mxu0 0
        %996 = vmatprep.subr.bf16.mxu0 0
        %997 = vmatpush1.bf16.msra.mxu0 0
        %998 = vmatprep.subr.bf16.mxu0 0
        %999 = vmatpush1.bf16.msra.mxu0 0
        %1000 = vmatprep.subr.bf16.mxu0 0
        %1001 = vmatpush1.bf16.msra.mxu0 0
        %1002 = vmatprep.subr.bf16.mxu0 0
        %1003 = vmatpush1.bf16.msra.mxu0 0
        %1004 = vmatprep.subr.bf16.mxu0 0
        %1005 = vmatpush1.bf16.msra.mxu0 0
        %1006 = vmatprep.subr.bf16.mxu0 0
        %1007 = vmatpush1.bf16.msra.mxu0 0
        %1008 = vmatprep.subr.bf16.mxu0 0
        %1009 = vmatpush1.bf16.msra.mxu0 0
        %1010 = vmatprep.mubr.bf16.mxu0 0
        %1011 = vmatmul.mubr.bf16.gmra.mrb[0].mxu0 %v973
        %v1012 = vpop.f32.mrb[0].mxu0
        %v1013 = vadd.f32 0.0, %v1012
        %v1014 = vpop.f32.mrb[0].mxu0
        %v1015 = vpop.f32.mrb[0].mxu0
        %v1016 = vpop.f32.mrb[0].mxu0
        %1017 = vdwg.mxu0
        %v1018 = vadd.f32 %v859, %v1013
        %v1019 = vld [vmem:[%s5] sm:$0x1]
        %v1021 = vlaneseq
        %v1022 = vshrl.u32 %v1021, 7
        %v1023 = vsub.s32 0, %v1022
        %v1024 = vrot.slane %v1019, %v1023
        %v1026 = vadd.f32 %v1018, %v1024
        %1027 = vst.msk [vmem:[%s306] sm:$0xff] %vm326, %v1026
        %s1028 = sand.u32 %s168, 1
        %s1029 = scalar_lea.sflag [#allocation4], %s1028
        %s1030 = sand.u32 %s168, 1
        %s1031 = smul.addr %s1030, 8
        %s1032 = scalar_lea.vmem [#allocation8], %s1031
        // Predicated region
        $region57: #{tpu_custom_call.1} parent=43 // pred_check
          %p1033 = pneg %p178
        $region58: #{tpu_custom_call.1} parent=43 // pred_check_branch
          %1035 = sbr.rel (%p1033) target = $region60
        $region59: #{tpu_custom_call.1} parent=43 // pred_region
          %s1037 = ssub.s32 128, 128
          %1038 = vsyncadd %s1029, %s1037
          %s1039 = smul.addr %s24, 128
          %s1040 = scalar_lea.hbm %s6, %s1039
          %s1042 = sshll.u32 %s1032, 4
          %s1043 = int_to_ptr.vmem [resolvable:$true] %s1042
          %1045 = dma.vmem_to_hbm [thread:$0]  %s1043, 128, %s1040, %s1029
        $region60: #{tpu_custom_call.1} parent=43 // pred_fallthru
          _
      $region44: #{tpu_custom_call.1} parent=5 // pred_fallthru
        _
      %p1046 = scmp.le.s32.totalorder 2, %s19
      // Predicated region
      $region61: #{tpu_custom_call.1} parent=5 // pred_check
        %p1047 = pneg %p1046
      $region62: #{tpu_custom_call.1} parent=5 // pred_check_branch
        %1049 = sbr.rel (%p1047) target = $region64
      $region63: #{tpu_custom_call.1} parent=5 // pred_region
        %s1050 = ssub.s32 %s19, 2
        // Predicated region
        $region65: #{tpu_custom_call.1} parent=63 // pred_check
          %p1051 = pneg %p184
        $region66: #{tpu_custom_call.1} parent=63 // pred_check_branch
          %1053 = sbr.rel (%p1051) target = $region68
        $region67: #{tpu_custom_call.1} parent=63 // pred_region
          %s1054 = sand.u32 %s169, 1
          %s1055 = scalar_lea.sflag [#allocation4], %s1054
          %s1056 = sand.u32 %s169, 1
          %s1057 = smul.addr %s1056, 8
          %s1058 = scalar_lea.vmem [#allocation8], %s1057
          %1059 = dma.done %s1055, 128
        $region68: #{tpu_custom_call.1} parent=63 // pred_fallthru
          _
      $region64: #{tpu_custom_call.1} parent=5 // pred_fallthru
        _
    $region6: #{tpu_custom_call.1} parent=1 // loop_footer
      %s23 = sadd.s32 1, %s19
    $region7: #{tpu_custom_call.1} parent=1 // loop_footer_branch
      %18 = sbr.rel target = $region3
    $region8: #{tpu_custom_call.1} parent=1 // loop_exit
      _
    %1060 = vsyncpa [#allocation3], 1
    %s1061 = scalar_lea.sflag [#allocation3], 1
    %1062 = vsyncpa %s1061, 1
    %1063 = vsyncpa [#allocation6], 1
    %1064 = vsyncpa [#allocation4], 1
    %s1065 = scalar_lea.sflag [#allocation4], 1
    %1066 = vsyncpa %s1065, 1

// kernel: tpu_custom_call.1
$region0: #{tpu_custom_call.1}
  #allocation0 [shape = 'u32[]', space=smem, size = 0x4, offset = 0x4, fixed_abs, tag = 'smem constant byte address 0x4 - core index']
  #allocation1 [shape = 'u32[144,128]{1,0:T(1,128)}', space=vmem, size = 0x12000, scoped, tag = 'internal scratch']
  %s0 = inlined_call_operand.hbm [shape: f32[2,8,32], index: 0, kind: input, shape index: {}]
  %s1 = inlined_call_operand.vmem [shape: f32[2,1,8], index: 1, kind: input, shape index: {}]
  %s2 = inlined_call_operand.hbm [shape: f32[32,96], index: 2, kind: input, shape index: {}]
  %s3 = inlined_call_operand.vmem [shape: f32[1,96], index: 3, kind: input, shape index: {}]
  %s4 = inlined_call_operand.hbm [shape: f32[32,32], index: 4, kind: input, shape index: {}]
  %s5 = inlined_call_operand.vmem [shape: f32[1,32], index: 5, kind: input, shape index: {}]
  %s6 = inlined_call_operand.hbm [shape: f32[2,8,32], index: 6, kind: output, shape index: {}]
  %s7 = sld [smem:[#allocation0]]
  $region69: #{tpu_custom_call.1} parent=0
    _
  %s9 = ssub.s32 1, %s7
  %s10 = scalar_select 0, %s9, %s7
  $region1: #{tpu_custom_call.1} parent=0
    #allocation2 [shape = 'u8[8192]{0}', space=vmem, size = 0x2000, scoped, tag = 'input window, operand 0']
    #allocation3 [shape = 's32[2]{0}', space=sflag, size = 0x8, scoped, tag = 'scoped memory for tpu_custom_call.1']
    #allocation4 [shape = 's32[2]{0}', space=sflag, size = 0x8, scoped, tag = 'scoped memory for tpu_custom_call.1']
    #allocation5 [shape = 'u8[16384]{0}', space=vmem, size = 0x4000, scoped, tag = 'input window, operand 2, single buffered']
    #allocation6 [shape = 's32[1]{0}', space=sflag, size = 0x4, scoped, tag = 'scoped memory for tpu_custom_call.1']
    #allocation7 [shape = 'u8[16384]{0}', space=vmem, size = 0x4000, scoped, tag = 'input window, operand 4, single buffered']
    #allocation8 [shape = 'u8[8192]{0}', space=vmem, size = 0x2000, scoped, tag = 'output window, operand 0']
    %11 = vsyncpa [#allocation3], 0
    %s12 = scalar_lea.sflag [#allocation3], 1
    %13 = vsyncpa %s12, 0
    %14 = vsyncpa [#allocation6], 0
    %15 = vsyncpa [#allocation4], 0
    %s16 = scalar_lea.sflag [#allocation4], 1
    %17 = vsyncpa %s16, 0
    loop: start=0, step=1, limit=4
    $region2: #{tpu_custom_call.1} parent=1 // loop_pre_header
      _
    $region3: #{tpu_custom_call.1} parent=1 // loop_header
      %s19 = sphi 0, %s23
      %p20 = scmp.ge.s32.totalorder %s19, 4
      %s29 = sphi 0, %s31
      %s32 = sphi 0, %s29
      %s33 = sphi 0, %s32
      %s49 = sphi 0, %s33
      %s55 = sphi 0, %s57
      %s58 = sphi 0, %s55
      %s59 = sphi 0, %s58
      %s75 = sphi 0, %s59
      %s79 = sphi 0, %s79
      %s81 = sphi 0, %s79
      %s82 = sphi 0, %s81
      %s96 = sphi 0, %s82
      %s100 = sphi 0, %s100
      %s102 = sphi 0, %s100
      %s103 = sphi 0, %s102
      %s117 = sphi 0, %s103
      %s121 = sphi 0, %s121
      %s123 = sphi 0, %s121
      %s124 = sphi 0, %s123
      %s138 = sphi 0, %s124
      %s142 = sphi 0, %s142
      %s144 = sphi 0, %s142
      %s145 = sphi 0, %s144
      %s159 = sphi 0, %s145
      %s165 = sphi 0, %s167
      %s168 = sphi 0, %s165
      %s169 = sphi 0, %s168
      %s185 = sphi 0, %s169
    $region4: #{tpu_custom_call.1} parent=1 // loop_header_branch
      %22 = sbr.rel (%p20) target = $region8
    $region5: #{tpu_custom_call.1} parent=1 // loop_body
      %s24 = ssub.s32 %s19, 1
      %s25 = ssub.s32 %s19, 2
      %s26 = sadd.s32 %s19, 1
      %s27 = ssub.s32 %s19, %s26
      %p28 = scmp.eq.s32.totalorder %s27, 0
      %s30 = sadd.s32 %s29, 1
      %s31 = scalar_select %p28, %s29, %s30
      %p34 = pneg %p28
      %p35 = scmp.eq.s32.totalorder %s19, 1
      %p36 = por %p34, %p35
      %p37 = scmp.ne.s32.totalorder %s29, %s32
      %p38 = scmp.eq.s32.totalorder %s19, 0
      %p39 = por %p37, %p38
      %p40 = scmp.ne.s32.totalorder %s29, %s32
      %p41 = scmp.eq.s32.totalorder %s24, 1
      %p42 = por %p40, %p41
      %p43 = scmp.ne.s32.totalorder %s32, %s33
      %p44 = scmp.eq.s32.totalorder %s24, 0
      %p45 = por %p43, %p44
      %p46 = scmp.ne.s32.totalorder %s32, %s33
      %p47 = scmp.eq.s32.totalorder %s25, 1
      %p48 = por %p46, %p47
      %p50 = scmp.ne.s32.totalorder %s33, %s49
      %p51 = scmp.eq.s32.totalorder %s25, 0
      %p52 = por %p50, %p51
      %s53 = ssub.s32 %s19, %s26
      %p54 = scmp.eq.s32.totalorder %s53, 0
      %s56 = sadd.s32 %s55, 1
      %s57 = scalar_select %p54, %s55, %s56
      %p60 = pneg %p54
      %p61 = scmp.eq.s32.totalorder %s19, 1
      %p62 = por %p60, %p61
      %p63 = scmp.ne.s32.totalorder %s55, %s58
      %p64 = scmp.eq.s32.totalorder %s19, 0
      %p65 = por %p63, %p64
      %p66 = scmp.ne.s32.totalorder %s55, %s58
      %p67 = scmp.eq.s32.totalorder %s24, 1
      %p68 = por %p66, %p67
      %p69 = scmp.ne.s32.totalorder %s58, %s59
      %p70 = scmp.eq.s32.totalorder %s24, 0
      %p71 = por %p69, %p70
      %p72 = scmp.ne.s32.totalorder %s58, %s59
      %p73 = scmp.eq.s32.totalorder %s25, 1
      %p74 = por %p72, %p73
      %p76 = scmp.ne.s32.totalorder %s59, %s75
      %p77 = scmp.eq.s32.totalorder %s25, 0
      %p78 = por %p76, %p77
      %s80 = sadd.s32 %s79, 1
      %p83 = scmp.eq.s32.totalorder %s19, 1
      %p84 = scmp.ne.s32.totalorder %s79, %s81
      %p85 = scmp.eq.s32.totalorder %s19, 0
      %p86 = por %p84, %p85
      %p87 = scmp.ne.s32.totalorder %s79, %s81
      %p88 = scmp.eq.s32.totalorder %s24, 1
      %p89 = por %p87, %p88
      %p90 = scmp.ne.s32.totalorder %s81, %s82
      %p91 = scmp.eq.s32.totalorder %s24, 0
      %p92 = por %p90, %p91
      %p93 = scmp.ne.s32.totalorder %s81, %s82
      %p94 = scmp.eq.s32.totalorder %s25, 1
      %p95 = por %p93, %p94
      %p97 = scmp.ne.s32.totalorder %s82, %s96
      %p98 = scmp.eq.s32.totalorder %s25, 0
      %p99 = por %p97, %p98
      %s101 = sadd.s32 %s100, 1
      %p104 = scmp.eq.s32.totalorder %s19, 1
      %p105 = scmp.ne.s32.totalorder %s100, %s102
      %p106 = scmp.eq.s32.totalorder %s19, 0
      %p107 = por %p105, %p106
      %p108 = scmp.ne.s32.totalorder %s100, %s102
      %p109 = scmp.eq.s32.totalorder %s24, 1
      %p110 = por %p108, %p109
      %p111 = scmp.ne.s32.totalorder %s102, %s103
      %p112 = scmp.eq.s32.totalorder %s24, 0
      %p113 = por %p111, %p112
      %p114 = scmp.ne.s32.totalorder %s102, %s103
      %p115 = scmp.eq.s32.totalorder %s25, 1
      %p116 = por %p114, %p115
      %p118 = scmp.ne.s32.totalorder %s103, %s117
      %p119 = scmp.eq.s32.totalorder %s25, 0
      %p120 = por %p118, %p119
      %s122 = sadd.s32 %s121, 1
      %p125 = scmp.eq.s32.totalorder %s19, 1
      %p126 = scmp.ne.s32.totalorder %s121, %s123
      %p127 = scmp.eq.s32.totalorder %s19, 0
      %p128 = por %p126, %p127
      %p129 = scmp.ne.s32.totalorder %s121, %s123
      %p130 = scmp.eq.s32.totalorder %s24, 1
      %p131 = por %p129, %p130
      %p132 = scmp.ne.s32.totalorder %s123, %s124
      %p133 = scmp.eq.s32.totalorder %s24, 0
      %p134 = por %p132, %p133
      %p135 = scmp.ne.s32.totalorder %s123, %s124
      %p136 = scmp.eq.s32.totalorder %s25, 1
      %p137 = por %p135, %p136
      %p139 = scmp.ne.s32.totalorder %s124, %s138
      %p140 = scmp.eq.s32.totalorder %s25, 0
      %p141 = por %p139, %p140
      %s143 = sadd.s32 %s142, 1
      %p146 = scmp.eq.s32.totalorder %s19, 1
      %p147 = scmp.ne.s32.totalorder %s142, %s144
      %p148 = scmp.eq.s32.totalorder %s19, 0
      %p149 = por %p147, %p148
      %p150 = scmp.ne.s32.totalorder %s142, %s144
      %p151 = scmp.eq.s32.totalorder %s24, 1
      %p152 = por %p150, %p151
      %p153 = scmp.ne.s32.totalorder %s144, %s145
      %p154 = scmp.eq.s32.totalorder %s24, 0
      %p155 = por %p153, %p154
      %p156 = scmp.ne.s32.totalorder %s144, %s145
      %p157 = scmp.eq.s32.totalorder %s25, 1
      %p158 = por %p156, %p157
      %p160 = scmp.ne.s32.totalorder %s145, %s159
      %p161 = scmp.eq.s32.totalorder %s25, 0
      %p162 = por %p160, %p161
      %s163 = ssub.s32 %s19, %s26
      %p164 = scmp.eq.s32.totalorder %s163, 0
      %s166 = sadd.s32 %s165, 1
      %s167 = scalar_select %p164, %s165, %s166
      %p170 = pneg %p164
      %p171 = scmp.eq.s32.totalorder %s19, 1
      %p172 = por %p170, %p171
      %p173 = scmp.ne.s32.totalorder %s165, %s168
      %p174 = scmp.eq.s32.totalorder %s19, 0
      %p175 = por %p173, %p174
      %p176 = scmp.ne.s32.totalorder %s165, %s168
      %p177 = scmp.eq.s32.totalorder %s24, 1
      %p178 = por %p176, %p177
      %p179 = scmp.ne.s32.totalorder %s168, %s169
      %p180 = scmp.eq.s32.totalorder %s24, 0
      %p181 = por %p179, %p180
      %p182 = scmp.ne.s32.totalorder %s168, %s169
      %p183 = scmp.eq.s32.totalorder %s25, 1
      %p184 = por %p182, %p183
      %p186 = scmp.ne.s32.totalorder %s169, %s185
      %p187 = scmp.eq.s32.totalorder %s25, 0
      %p188 = por %p186, %p187
      %p189 = scmp.le.s32.totalorder 1, %s19
      %p190 = scmp.lt.s32.totalorder %s19, 3
      %p191 = pnand %p189, %p190
      %p192 = pneg %p191
      // Predicated region
      $region9: #{tpu_custom_call.1} parent=5 // pred_check
        _
      $region10: #{tpu_custom_call.1} parent=5 // pred_check_branch
        %194 = sbr.rel (%p191) target = $region12
      $region11: #{tpu_custom_call.1} parent=5 // pred_region
        %s195 = ssub.s32 %s19, 1
        // Predicated region
        $region13: #{tpu_custom_call.1} parent=11 // pred_check
          %p196 = pneg %p92
        $region14: #{tpu_custom_call.1} parent=11 // pred_check_branch
          %198 = sbr.rel (%p196) target = $region16
        $region15: #{tpu_custom_call.1} parent=11 // pred_region
          %s200 = ssub.s32 512, 512
          %201 = vsyncadd [#allocation6], %s200
          %s202 = sshll.u32 [#allocation5], 4
          %s203 = int_to_ptr.vmem [resolvable:$true] %s202
          %208 = dma.hbm_to_vmem [thread:$0]  %s2, 512, %s203, [#allocation6], 128, 128, 8
        $region16: #{tpu_custom_call.1} parent=11 // pred_fallthru
          _
        // Predicated region
        $region17: #{tpu_custom_call.1} parent=11 // pred_check
          %p209 = pneg %p113
        $region18: #{tpu_custom_call.1} parent=11 // pred_check_branch
          %211 = sbr.rel (%p209) target = $region20
        $region19: #{tpu_custom_call.1} parent=11 // pred_region
          _
        $region20: #{tpu_custom_call.1} parent=11 // pred_fallthru
          _
        // Predicated region
        $region21: #{tpu_custom_call.1} parent=11 // pred_check
          %p212 = pneg %p134
        $region22: #{tpu_custom_call.1} parent=11 // pred_check_branch
          %214 = sbr.rel (%p212) target = $region24
        $region23: #{tpu_custom_call.1} parent=11 // pred_region
          %s216 = ssub.s32 512, 512
          %217 = vsyncadd [#allocation6], %s216
          %s218 = sshll.u32 [#allocation7], 4
          %s219 = int_to_ptr.vmem [resolvable:$true] %s218
          %224 = dma.hbm_to_vmem [thread:$0]  %s4, 512, %s219, [#allocation6], 128, 128, 8
        $region24: #{tpu_custom_call.1} parent=11 // pred_fallthru
          _
        // Predicated region
        $region25: #{tpu_custom_call.1} parent=11 // pred_check
          %p225 = pneg %p155
        $region26: #{tpu_custom_call.1} parent=11 // pred_check_branch
          %227 = sbr.rel (%p225) target = $region28
        $region27: #{tpu_custom_call.1} parent=11 // pred_region
          _
        $region28: #{tpu_custom_call.1} parent=11 // pred_fallthru
          _
      $region12: #{tpu_custom_call.1} parent=5 // pred_fallthru
        _
      %p228 = scmp.lt.s32.totalorder %s19, 2
      // Predicated region
      $region29: #{tpu_custom_call.1} parent=5 // pred_check
        %p229 = pneg %p228
      $region30: #{tpu_custom_call.1} parent=5 // pred_check_branch
        %231 = sbr.rel (%p229) target = $region32
      $region31: #{tpu_custom_call.1} parent=5 // pred_region
        // Predicated region
        $region33: #{tpu_custom_call.1} parent=31 // pred_check
          %p232 = pneg %p39
        $region34: #{tpu_custom_call.1} parent=31 // pred_check_branch
          %234 = sbr.rel (%p232) target = $region36
        $region35: #{tpu_custom_call.1} parent=31 // pred_region
          %s235 = sand.u32 %s29, 1
          %s236 = scalar_lea.sflag [#allocation3], %s235
          %s237 = sand.u32 %s29, 1
          %s238 = smul.addr %s237, 8
          %s239 = scalar_lea.vmem [#allocation2], %s238
          %s241 = ssub.s32 128, 128
          %242 = vsyncadd %s236, %s241
          %s243 = smul.addr %s19, 128
          %s244 = scalar_lea.hbm %s0, %s243
          %s246 = sshll.u32 %s239, 4
          %s247 = int_to_ptr.vmem [resolvable:$true] %s246
          %249 = dma.hbm_to_vmem [thread:$0]  %s244, 128, %s247, %s236
        $region36: #{tpu_custom_call.1} parent=31 // pred_fallthru
          _
        // Predicated region
        $region37: #{tpu_custom_call.1} parent=31 // pred_check
          %p250 = pneg %p65
        $region38: #{tpu_custom_call.1} parent=31 // pred_check_branch
          %252 = sbr.rel (%p250) target = $region40
        $region39: #{tpu_custom_call.1} parent=31 // pred_region
          %p253 = scmp.lt.s32.totalorder %s19, 1
          %s254 = scalar_select %p253, %s19, 1
          %s255 = scalar_lea.vmem %s1, %s254
        $region40: #{tpu_custom_call.1} parent=31 // pred_fallthru
          _
      $region32: #{tpu_custom_call.1} parent=5 // pred_fallthru
        _
      %p256 = scmp.le.s32.totalorder 1, %s19
      %p257 = scmp.lt.s32.totalorder %s19, 3
      %p258 = pnand %p256, %p257
      %p259 = pneg %p258
      // Predicated region
      $region41: #{tpu_custom_call.1} parent=5 // pred_check
        _
      $region42: #{tpu_custom_call.1} parent=5 // pred_check_branch
        %261 = sbr.rel (%p258) target = $region44
      $region43: #{tpu_custom_call.1} parent=5 // pred_region
        %s262 = ssub.s32 %s19, 1
        %s263 = sand.u32 %s32, 1
        %s264 = scalar_lea.sflag [#allocation3], %s263
        %s265 = sand.u32 %s32, 1
        %s266 = smul.addr %s265, 8
        %s267 = scalar_lea.vmem [#allocation2], %s266
        // Predicated region
        $region45: #{tpu_custom_call.1} parent=43 // pred_check
          %p268 = pneg %p45
        $region46: #{tpu_custom_call.1} parent=43 // pred_check_branch
          %270 = sbr.rel (%p268) target = $region48
        $region47: #{tpu_custom_call.1} parent=43 // pred_region
          %271 = dma.done %s264, 128
        $region48: #{tpu_custom_call.1} parent=43 // pred_fallthru
          _
        // Predicated region
        $region49: #{tpu_custom_call.1} parent=43 // pred_check
          %p272 = pneg %p92
        $region50: #{tpu_custom_call.1} parent=43 // pred_check_branch
          %274 = sbr.rel (%p272) target = $region52
        $region51: #{tpu_custom_call.1} parent=43 // pred_region
          %275 = dma.done [#allocation6], 512
        $region52: #{tpu_custom_call.1} parent=43 // pred_fallthru
          _
        // Predicated region
        $region53: #{tpu_custom_call.1} parent=43 // pred_check
          %p276 = pneg %p134
        $region54: #{tpu_custom_call.1} parent=43 // pred_check_branch
          %278 = sbr.rel (%p276) target = $region56
        $region55: #{tpu_custom_call.1} parent=43 // pred_region
          %279 = dma.done [#allocation6], 512
        $region56: #{tpu_custom_call.1} parent=43 // pred_fallthru
          _
        %s280 = sand.u32 %s32, 1
        %s281 = scalar_lea.sflag [#allocation3], %s280
        %s282 = sand.u32 %s32, 1
        %s283 = smul.addr %s282, 8
        %s284 = scalar_lea.vmem [#allocation2], %s283
        %p285 = pneg %p45
        %p286 = pneg %p42
        %p287 = scmp.lt.s32.totalorder %s24, 1
        %s288 = scalar_select %p287, %s24, 1
        %s289 = scalar_lea.vmem %s1, %s288
        %p290 = pneg %p71
        %p291 = pneg %p68
        %p292 = pneg %p92
        %p293 = pneg %p89
        %p294 = pneg %p113
        %p295 = pneg %p110
        %p296 = pneg %p134
        %p297 = pneg %p131
        %p298 = pneg %p155
        %p299 = pneg %p152
        %p300 = pneg %p181
        %p301 = pneg %p178
        %s302 = sand.u32 %s168, 1
        %s303 = scalar_lea.sflag [#allocation4], %s302
        %s304 = sand.u32 %s168, 1
        %s305 = smul.addr %s304, 8
        %s306 = scalar_lea.vmem [#allocation8], %s305
        %p307 = scmp.lt.s32.totalorder %s24, 1
        %s308 = scalar_select %p307, %s24, 1
        %s309 = scalar_lea.vmem %s1, %s308
        %v311 = vld [vmem:[%s267] sm:$0xff]
        %v312 = vld [vmem:[#allocation5] sm:$0xff]
        %v313 = vld [vmem:[#allocation5 + $0x8] sm:$0xff]
        %v314 = vld [vmem:[#allocation5 + $0x10] sm:$0xff]
        %v315 = vld [vmem:[#allocation5 + $0x18] sm:$0xff]
        %v316 = vpack.c.bf16 %v311, %v311
        %v317 = vpack.c.bf16 %v313, %v312
        %v318 = vpack.c.bf16 %v315, %v314
        %v319 = vld [vmem:[%s3] sm:$0x1]
        %v321 = vlaneseq
        %v322 = vshrl.u32 %v321, 7
        %v323 = vsub.s32 0, %v322
        %v324 = vrot.slane %v319, %v323
        %vm326 = vcmask 261120
        %v328 = vsel %vm326, %v316, 0
        %330 = vmatprep.subr.bf16.mxu0 0
        %331 = vmatpush1.bf16.msra.mxu0 %v317
        %332 = vmatprep.subr.bf16.mxu0 0
        %333 = vmatpush1.bf16.msra.mxu0 %v318
        %334 = vmatprep.subr.bf16.mxu0 0
        %335 = vmatpush1.bf16.msra.mxu0 0
        %336 = vmatprep.subr.bf16.mxu0 0
        %337 = vmatpush1.bf16.msra.mxu0 0
        %338 = vmatprep.subr.bf16.mxu0 0
        %339 = vmatpush1.bf16.msra.mxu0 0
        %340 = vmatprep.subr.bf16.mxu0 0
        %341 = vmatpush1.bf16.msra.mxu0 0
        %342 = vmatprep.subr.bf16.mxu0 0
        %343 = vmatpush1.bf16.msra.mxu0 0
        %344 = vmatprep.subr.bf16.mxu0 0
        %345 = vmatpush1.bf16.msra.mxu0 0
        %346 = vmatprep.subr.bf16.mxu0 0
        %347 = vmatpush1.bf16.msra.mxu0 0
        %348 = vmatprep.subr.bf16.mxu0 0
        %349 = vmatpush1.bf16.msra.mxu0 0
        %350 = vmatprep.subr.bf16.mxu0 0
        %351 = vmatpush1.bf16.msra.mxu0 0
        %352 = vmatprep.subr.bf16.mxu0 0
        %353 = vmatpush1.bf16.msra.mxu0 0
        %354 = vmatprep.subr.bf16.mxu0 0
        %355 = vmatpush1.bf16.msra.mxu0 0
        %356 = vmatprep.subr.bf16.mxu0 0
        %357 = vmatpush1.bf16.msra.mxu0 0
        %358 = vmatprep.subr.bf16.mxu0 0
        %359 = vmatpush1.bf16.msra.mxu0 0
        %360 = vmatprep.subr.bf16.mxu0 0
        %361 = vmatpush1.bf16.msra.mxu0 0
        %362 = vmatprep.mubr.bf16.mxu0 0
        %363 = vmatmul.mubr.bf16.gmra.mrb[0].mxu0 %v328
        %v364 = vpop.f32.mrb[0].mxu0
        %v365 = vadd.f32 %v324, %v364
        %v366 = vpop.f32.mrb[0].mxu0
        %v367 = vpop.f32.mrb[0].mxu0
        %v368 = vpop.f32.mrb[0].mxu0
        %369 = vdwg.mxu0
        %v370 = vld [vmem:[%s309] sm:$0x1]
        %v371 = vld [vmem:[#allocation7] sm:$0xff]
        %v372 = vld [vmem:[#allocation7 + $0x8] sm:$0xff]
        %v373 = vld [vmem:[#allocation7 + $0x10] sm:$0xff]
        %v374 = vld [vmem:[#allocation7 + $0x18] sm:$0xff]
        %vm375 = vcmp.eq.f32.partialorder %v370, 0.0
        %v376 = vsel %vm375, -1e+09, 0.0
        %v377 = vpack.c.bf16 %v365, %v365
        %v379 = vlaneseq
        %v380 = vshrl.u32 %v379, 7
        %v381 = vsub.s32 0, %v380
        %v382 = vrot.slane %v376, %v381
        %385 = vrot.lane.b32.xlu0 %v377, 96
        %v386 = vpop.permute.xlu0 %385
        %vm387 = vcmask 64512
        %v389 = vsel %vm387, %v377, 0
        %v392 = vsel %vm387, %v386, 0
        %394 = vmatprep.subr.bf16.mxu0 0
        %395 = vmatpush1.bf16.xpose.msra.mxu0 %v392
        %396 = vmatprep.subr.bf16.mxu0 0
        %397 = vmatpush1.bf16.xpose.msra.mxu0 0
        %398 = vmatprep.subr.bf16.mxu0 0
        %399 = vmatpush1.bf16.xpose.msra.mxu0 0
        %400 = vmatprep.subr.bf16.mxu0 0
        %401 = vmatpush1.bf16.xpose.msra.mxu0 0
        %402 = vmatprep.subr.bf16.mxu0 0
        %403 = vmatpush1.bf16.xpose.msra.mxu0 0
        %404 = vmatprep.subr.bf16.mxu0 0
        %405 = vmatpush1.bf16.xpose.msra.mxu0 0
        %406 = vmatprep.subr.bf16.mxu0 0
        %407 = vmatpush1.bf16.xpose.msra.mxu0 0
        %408 = vmatprep.subr.bf16.mxu0 0
        %409 = vmatpush1.bf16.xpose.msra.mxu0 0
        %410 = vmatprep.subr.bf16.mxu0 0
        %411 = vmatpush1.bf16.xpose.msra.mxu0 0
        %412 = vmatprep.subr.bf16.mxu0 0
        %413 = vmatpush1.bf16.xpose.msra.mxu0 0
        %414 = vmatprep.subr.bf16.mxu0 0
        %415 = vmatpush1.bf16.xpose.msra.mxu0 0
        %416 = vmatprep.subr.bf16.mxu0 0
        %417 = vmatpush1.bf16.xpose.msra.mxu0 0
        %418 = vmatprep.subr.bf16.mxu0 0
        %419 = vmatpush1.bf16.xpose.msra.mxu0 0
        %420 = vmatprep.subr.bf16.mxu0 0
        %421 = vmatpush1.bf16.xpose.msra.mxu0 0
        %422 = vmatprep.subr.bf16.mxu0 0
        %423 = vmatpush1.bf16.xpose.msra.mxu0 0
        %424 = vmatprep.subr.bf16.mxu0 0
        %425 = vmatpush1.bf16.xpose.msra.mxu0 0
        %426 = vmatprep.mubr.bf16.mxu0 0
        %427 = vmatmul.mubr.bf16.gmra.mrb[0].mxu0 %v389
        %v428 = vpop.f32.mrb[0].mxu0
        %v429 = vadd.f32 %v382, %v428
        %v430 = vpop.f32.mrb[0].mxu0
        %v431 = vpop.f32.mrb[0].mxu0
        %v432 = vpop.f32.mrb[0].mxu0
        %433 = vdwg.mxu0
        %v434 = vsel %vm387, %v429, -inf
        %435 = vmax.xlane.f32.xlu0 %v434
        %v436 = vpop.xlane.xlu0 %435
        %v437 = vsub.f32 %v429, %v436
        %v438 = vmul.f32 %v437, 1.442695
        %v439 = vpow.pop %v438
        %v440 = vsel %vm387, %v439, 0.0
        %441 = vadd.xlane.f32.xlu0 %v440
        %v442 = vpop.xlane.xlu0 %441
        %v443 = vrcp.pop %v442
        %v444 = vmul.f32 %v439, %v443
        %v445 = vpack.c.bf16 %v444, %v444
        %446 = vrot.lane.b32.xlu0 %v377, 64
        %v447 = vpop.permute.xlu0 %446
        %v449 = vsel %vm387, %v445, 0
        %vm451 = vcmask 1043456
        %v453 = vsel %vm451, %v447, 0
        %455 = vmatprep.subr.bf16.mxu0 0
        %456 = vmatpush1.bf16.msra.mxu0 %v453
        %457 = vmatprep.subr.bf16.mxu0 0
        %458 = vmatpush1.bf16.msra.mxu0 0
        %459 = vmatprep.subr.bf16.mxu0 0
        %460 = vmatpush1.bf16.msra.mxu0 0
        %461 = vmatprep.subr.bf16.mxu0 0
        %462 = vmatpush1.bf16.msra.mxu0 0
        %463 = vmatprep.subr.bf16.mxu0 0
        %464 = vmatpush1.bf16.msra.mxu0 0
        %465 = vmatprep.subr.bf16.mxu0 0
        %466 = vmatpush1.bf16.msra.mxu0 0
        %467 = vmatprep.subr.bf16.mxu0 0
        %468 = vmatpush1.bf16.msra.mxu0 0
        %469 = vmatprep.subr.bf16.mxu0 0
        %470 = vmatpush1.bf16.msra.mxu0 0
        %471 = vmatprep.subr.bf16.mxu0 0
        %472 = vmatpush1.bf16.msra.mxu0 0
        %473 = vmatprep.subr.bf16.mxu0 0
        %474 = vmatpush1.bf16.msra.mxu0 0
        %475 = vmatprep.subr.bf16.mxu0 0
        %476 = vmatpush1.bf16.msra.mxu0 0
        %477 = vmatprep.subr.bf16.mxu0 0
        %478 = vmatpush1.bf16.msra.mxu0 0
        %479 = vmatprep.subr.bf16.mxu0 0
        %480 = vmatpush1.bf16.msra.mxu0 0
        %481 = vmatprep.subr.bf16.mxu0 0
        %482 = vmatpush1.bf16.msra.mxu0 0
        %483 = vmatprep.subr.bf16.mxu0 0
        %484 = vmatpush1.bf16.msra.mxu0 0
        %485 = vmatprep.subr.bf16.mxu0 0
        %486 = vmatpush1.bf16.msra.mxu0 0
        %487 = vmatprep.mubr.bf16.mxu0 0
        %488 = vmatmul.mubr.bf16.gmra.mrb[0].mxu0 %v449
        %v489 = vpop.f32.mrb[0].mxu0
        %v490 = vadd.f32 0.0, %v489
        %v491 = vpop.f32.mrb[0].mxu0
        %v492 = vpop.f32.mrb[0].mxu0
        %v493 = vpop.f32.mrb[0].mxu0
        %494 = vdwg.mxu0
        %v495 = vpack.c.bf16 %v490, %v490
        %v496 = vpack.c.bf16 %v371, %v371
        %497 = vrot.lane.b32.xlu0 %v377, 120
        %v498 = vpop.permute.xlu0 %497
        %499 = vrot.lane.b32.xlu0 %v377, 88
        %v500 = vpop.permute.xlu0 %499
        %v502 = vsel %vm387, %v498, 0
        %v505 = vsel %vm387, %v500, 0
        %507 = vmatprep.subr.bf16.mxu0 0
        %508 = vmatpush1.bf16.xpose.msra.mxu0 %v505
        %509 = vmatprep.subr.bf16.mxu0 0
        %510 = vmatpush1.bf16.xpose.msra.mxu0 0
        %511 = vmatprep.subr.bf16.mxu0 0
        %512 = vmatpush1.bf16.xpose.msra.mxu0 0
        %513 = vmatprep.subr.bf16.mxu0 0
        %514 = vmatpush1.bf16.xpose.msra.mxu0 0
        %515 = vmatprep.subr.bf16.mxu0 0
        %516 = vmatpush1.bf16.xpose.msra.mxu0 0
        %517 = vmatprep.subr.bf16.mxu0 0
        %518 = vmatpush1.bf16.xpose.msra.mxu0 0
        %519 = vmatprep.subr.bf16.mxu0 0
        %520 = vmatpush1.bf16.xpose.msra.mxu0 0
        %521 = vmatprep.subr.bf16.mxu0 0
        %522 = vmatpush1.bf16.xpose.msra.mxu0 0
        %523 = vmatprep.subr.bf16.mxu0 0
        %524 = vmatpush1.bf16.xpose.msra.mxu0 0
        %525 = vmatprep.subr.bf16.mxu0 0
        %526 = vmatpush1.bf16.xpose.msra.mxu0 0
        %527 = vmatprep.subr.bf16.mxu0 0
        %528 = vmatpush1.bf16.xpose.msra.mxu0 0
        %529 = vmatprep.subr.bf16.mxu0 0
        %530 = vmatpush1.bf16.xpose.msra.mxu0 0
        %531 = vmatprep.subr.bf16.mxu0 0
        %532 = vmatpush1.bf16.xpose.msra.mxu0 0
        %533 = vmatprep.subr.bf16.mxu0 0
        %534 = vmatpush1.bf16.xpose.msra.mxu0 0
        %535 = vmatprep.subr.bf16.mxu0 0
        %536 = vmatpush1.bf16.xpose.msra.mxu0 0
        %537 = vmatprep.subr.bf16.mxu0 0
        %538 = vmatpush1.bf16.xpose.msra.mxu0 0
        %539 = vmatprep.mubr.bf16.mxu0 0
        %540 = vmatmul.mubr.bf16.gmra.mrb[0].mxu0 %v502
        %v541 = vpop.f32.mrb[0].mxu0
        %v542 = vadd.f32 %v382, %v541
        %v543 = vpop.f32.mrb[0].mxu0
        %v544 = vpop.f32.mrb[0].mxu0
        %v545 = vpop.f32.mrb[0].mxu0
        %546 = vdwg.mxu0
        %v547 = vsel %vm387, %v542, -inf
        %548 = vmax.xlane.f32.xlu0 %v547
        %v549 = vpop.xlane.xlu0 %548
        %v550 = vsub.f32 %v542, %v549
        %v551 = vmul.f32 %v550, 1.442695
        %v552 = vpow.pop %v551
        %v553 = vsel %vm387, %v552, 0.0
        %554 = vadd.xlane.f32.xlu0 %v553
        %v555 = vpop.xlane.xlu0 %554
        %v556 = vrcp.pop %v555
        %v557 = vmul.f32 %v552, %v556
        %v558 = vpack.c.bf16 %v557, %v557
        %559 = vrot.lane.b32.xlu0 %v377, 56
        %v560 = vpop.permute.xlu0 %559
        %v562 = vsel %vm387, %v558, 0
        %v565 = vsel %vm451, %v560, 0
        %567 = vmatprep.subr.bf16.mxu0 0
        %568 = vmatpush1.bf16.msra.mxu0 %v565
        %569 = vmatprep.subr.bf16.mxu0 0
        %570 = vmatpush1.bf16.msra.mxu0 0
        %571 = vmatprep.subr.bf16.mxu0 0
        %572 = vmatpush1.bf16.msra.mxu0 0
        %573 = vmatprep.subr.bf16.mxu0 0
        %574 = vmatpush1.bf16.msra.mxu0 0
        %575 = vmatprep.subr.bf16.mxu0 0
        %576 = vmatpush1.bf16.msra.mxu0 0
        %577 = vmatprep.subr.bf16.mxu0 0
        %578 = vmatpush1.bf16.msra.mxu0 0
        %579 = vmatprep.subr.bf16.mxu0 0
        %580 = vmatpush1.bf16.msra.mxu0 0
        %581 = vmatprep.subr.bf16.mxu0 0
        %582 = vmatpush1.bf16.msra.mxu0 0
        %583 = vmatprep.subr.bf16.mxu0 0
        %584 = vmatpush1.bf16.msra.mxu0 0
        %585 = vmatprep.subr.bf16.mxu0 0
        %586 = vmatpush1.bf16.msra.mxu0 0
        %587 = vmatprep.subr.bf16.mxu0 0
        %588 = vmatpush1.bf16.msra.mxu0 0
        %589 = vmatprep.subr.bf16.mxu0 0
        %590 = vmatpush1.bf16.msra.mxu0 0
        %591 = vmatprep.subr.bf16.mxu0 0
        %592 = vmatpush1.bf16.msra.mxu0 0
        %593 = vmatprep.subr.bf16.mxu0 0
        %594 = vmatpush1.bf16.msra.mxu0 0
        %595 = vmatprep.subr.bf16.mxu0 0
        %596 = vmatpush1.bf16.msra.mxu0 0
        %597 = vmatprep.subr.bf16.mxu0 0
        %598 = vmatpush1.bf16.msra.mxu0 0
        %599 = vmatprep.mubr.bf16.mxu0 0
        %600 = vmatmul.mubr.bf16.gmra.mrb[0].mxu0 %v562
        %v601 = vpop.f32.mrb[0].mxu0
        %v602 = vadd.f32 0.0, %v601
        %v603 = vpop.f32.mrb[0].mxu0
        %v604 = vpop.f32.mrb[0].mxu0
        %v605 = vpop.f32.mrb[0].mxu0
        %606 = vdwg.mxu0
        %v607 = vpack.c.bf16 %v602, %v602
        %v608 = vpack.c.bf16 %v372, %v372
        %v610 = vsel %vm387, %v607, 0
        %v613 = vsel %vm451, %v608, 0
        %615 = vmatprep.subr.bf16.mxu0 0
        %616 = vmatpush1.bf16.msra.mxu0 %v613
        %617 = vmatprep.subr.bf16.mxu0 0
        %618 = vmatpush1.bf16.msra.mxu0 0
        %619 = vmatprep.subr.bf16.mxu0 0
        %620 = vmatpush1.bf16.msra.mxu0 0
        %621 = vmatprep.subr.bf16.mxu0 0
        %622 = vmatpush1.bf16.msra.mxu0 0
        %623 = vmatprep.subr.bf16.mxu0 0
        %624 = vmatpush1.bf16.msra.mxu0 0
        %625 = vmatprep.subr.bf16.mxu0 0
        %626 = vmatpush1.bf16.msra.mxu0 0
        %627 = vmatprep.subr.bf16.mxu0 0
        %628 = vmatpush1.bf16.msra.mxu0 0
        %629 = vmatprep.subr.bf16.mxu0 0
        %630 = vmatpush1.bf16.msra.mxu0 0
        %631 = vmatprep.subr.bf16.mxu0 0
        %632 = vmatpush1.bf16.msra.mxu0 0
        %633 = vmatprep.subr.bf16.mxu0 0
        %634 = vmatpush1.bf16.msra.mxu0 0
        %635 = vmatprep.subr.bf16.mxu0 0
        %636 = vmatpush1.bf16.msra.mxu0 0
        %637 = vmatprep.subr.bf16.mxu0 0
        %638 = vmatpush1.bf16.msra.mxu0 0
        %639 = vmatprep.subr.bf16.mxu0 0
        %640 = vmatpush1.bf16.msra.mxu0 0
        %641 = vmatprep.subr.bf16.mxu0 0
        %642 = vmatpush1.bf16.msra.mxu0 0
        %643 = vmatprep.subr.bf16.mxu0 0
        %644 = vmatpush1.bf16.msra.mxu0 0
        %645 = vmatprep.subr.bf16.mxu0 0
        %646 = vmatpush1.bf16.msra.mxu0 0
        %647 = vmatprep.mubr.bf16.mxu0 0
        %648 = vmatmul.mubr.bf16.gmra.mrb[0].mxu0 %v610
        %v649 = vpop.f32.mrb[0].mxu0
        %v650 = vadd.f32 0.0, %v649
        %v651 = vpop.f32.mrb[0].mxu0
        %v652 = vpop.f32.mrb[0].mxu0
        %v653 = vpop.f32.mrb[0].mxu0
        %654 = vdwg.mxu0
        %v656 = vsel %vm387, %v495, 0
        %v659 = vsel %vm451, %v496, 0
        %661 = vmatprep.subr.bf16.mxu0 0
        %662 = vmatpush1.bf16.msra.mxu0 %v659
        %663 = vmatprep.subr.bf16.mxu0 0
        %664 = vmatpush1.bf16.msra.mxu0 0
        %665 = vmatprep.subr.bf16.mxu0 0
        %666 = vmatpush1.bf16.msra.mxu0 0
        %667 = vmatprep.subr.bf16.mxu0 0
        %668 = vmatpush1.bf16.msra.mxu0 0
        %669 = vmatprep.subr.bf16.mxu0 0
        %670 = vmatpush1.bf16.msra.mxu0 0
        %671 = vmatprep.subr.bf16.mxu0 0
        %672 = vmatpush1.bf16.msra.mxu0 0
        %673 = vmatprep.subr.bf16.mxu0 0
        %674 = vmatpush1.bf16.msra.mxu0 0
        %675 = vmatprep.subr.bf16.mxu0 0
        %676 = vmatpush1.bf16.msra.mxu0 0
        %677 = vmatprep.subr.bf16.mxu0 0
        %678 = vmatpush1.bf16.msra.mxu0 0
        %679 = vmatprep.subr.bf16.mxu0 0
        %680 = vmatpush1.bf16.msra.mxu0 0
        %681 = vmatprep.subr.bf16.mxu0 0
        %682 = vmatpush1.bf16.msra.mxu0 0
        %683 = vmatprep.subr.bf16.mxu0 0
        %684 = vmatpush1.bf16.msra.mxu0 0
        %685 = vmatprep.subr.bf16.mxu0 0
        %686 = vmatpush1.bf16.msra.mxu0 0
        %687 = vmatprep.subr.bf16.mxu0 0
        %688 = vmatpush1.bf16.msra.mxu0 0
        %689 = vmatprep.subr.bf16.mxu0 0
        %690 = vmatpush1.bf16.msra.mxu0 0
        %691 = vmatprep.subr.bf16.mxu0 0
        %692 = vmatpush1.bf16.msra.mxu0 0
        %693 = vmatprep.mubr.bf16.mxu0 0
        %694 = vmatmul.mubr.bf16.gmra.mrb[0].mxu0 %v656
        %v695 = vpop.f32.mrb[0].mxu0
        %v696 = vadd.f32 %v650, %v695
        %v697 = vpop.f32.mrb[0].mxu0
        %v698 = vpop.f32.mrb[0].mxu0
        %v699 = vpop.f32.mrb[0].mxu0
        %700 = vdwg.mxu0
        %701 = vrot.lane.b32.xlu0 %v377, 112
        %v702 = vpop.permute.xlu0 %701
        %703 = vrot.lane.b32.xlu0 %v377, 80
        %v704 = vpop.permute.xlu0 %703
        %v706 = vsel %vm387, %v702, 0
        %v709 = vsel %vm387, %v704, 0
        %711 = vmatprep.subr.bf16.mxu0 0
        %712 = vmatpush1.bf16.xpose.msra.mxu0 %v709
        %713 = vmatprep.subr.bf16.mxu0 0
        %714 = vmatpush1.bf16.xpose.msra.mxu0 0
        %715 = vmatprep.subr.bf16.mxu0 0
        %716 = vmatpush1.bf16.xpose.msra.mxu0 0
        %717 = vmatprep.subr.bf16.mxu0 0
        %718 = vmatpush1.bf16.xpose.msra.mxu0 0
        %719 = vmatprep.subr.bf16.mxu0 0
        %720 = vmatpush1.bf16.xpose.msra.mxu0 0
        %721 = vmatprep.subr.bf16.mxu0 0
        %722 = vmatpush1.bf16.xpose.msra.mxu0 0
        %723 = vmatprep.subr.bf16.mxu0 0
        %724 = vmatpush1.bf16.xpose.msra.mxu0 0
        %725 = vmatprep.subr.bf16.mxu0 0
        %726 = vmatpush1.bf16.xpose.msra.mxu0 0
        %727 = vmatprep.subr.bf16.mxu0 0
        %728 = vmatpush1.bf16.xpose.msra.mxu0 0
        %729 = vmatprep.subr.bf16.mxu0 0
        %730 = vmatpush1.bf16.xpose.msra.mxu0 0
        %731 = vmatprep.subr.bf16.mxu0 0
        %732 = vmatpush1.bf16.xpose.msra.mxu0 0
        %733 = vmatprep.subr.bf16.mxu0 0
        %734 = vmatpush1.bf16.xpose.msra.mxu0 0
        %735 = vmatprep.subr.bf16.mxu0 0
        %736 = vmatpush1.bf16.xpose.msra.mxu0 0
        %737 = vmatprep.subr.bf16.mxu0 0
        %738 = vmatpush1.bf16.xpose.msra.mxu0 0
        %739 = vmatprep.subr.bf16.mxu0 0
        %740 = vmatpush1.bf16.xpose.msra.mxu0 0
        %741 = vmatprep.subr.bf16.mxu0 0
        %742 = vmatpush1.bf16.xpose.msra.mxu0 0
        %743 = vmatprep.mubr.bf16.mxu0 0
        %744 = vmatmul.mubr.bf16.gmra.mrb[0].mxu0 %v706
        %v745 = vpop.f32.mrb[0].mxu0
        %v746 = vadd.f32 %v382, %v745
        %v747 = vpop.f32.mrb[0].mxu0
        %v748 = vpop.f32.mrb[0].mxu0
        %v749 = vpop.f32.mrb[0].mxu0
        %750 = vdwg.mxu0
        %v751 = vsel %vm387, %v746, -inf
        %752 = vmax.xlane.f32.xlu0 %v751
        %v753 = vpop.xlane.xlu0 %752
        %v754 = vsub.f32 %v746, %v753
        %v755 = vmul.f32 %v754, 1.442695
        %v756 = vpow.pop %v755
        %v757 = vsel %vm387, %v756, 0.0
        %758 = vadd.xlane.f32.xlu0 %v757
        %v759 = vpop.xlane.xlu0 %758
        %v760 = vrcp.pop %v759
        %v761 = vmul.f32 %v756, %v760
        %v762 = vpack.c.bf16 %v761, %v761
        %763 = vrot.lane.b32.xlu0 %v377, 48
        %v764 = vpop.permute.xlu0 %763
        %v766 = vsel %vm387, %v762, 0
        %v769 = vsel %vm451, %v764, 0
        %771 = vmatprep.subr.bf16.mxu0 0
        %772 = vmatpush1.bf16.msra.mxu0 %v769
        %773 = vmatprep.subr.bf16.mxu0 0
        %774 = vmatpush1.bf16.msra.mxu0 0
        %775 = vmatprep.subr.bf16.mxu0 0
        %776 = vmatpush1.bf16.msra.mxu0 0
        %777 = vmatprep.subr.bf16.mxu0 0
        %778 = vmatpush1.bf16.msra.mxu0 0
        %779 = vmatprep.subr.bf16.mxu0 0
        %780 = vmatpush1.bf16.msra.mxu0 0
        %781 = vmatprep.subr.bf16.mxu0 0
        %782 = vmatpush1.bf16.msra.mxu0 0
        %783 = vmatprep.subr.bf16.mxu0 0
        %784 = vmatpush1.bf16.msra.mxu0 0
        %785 = vmatprep.subr.bf16.mxu0 0
        %786 = vmatpush1.bf16.msra.mxu0 0
        %787 = vmatprep.subr.bf16.mxu0 0
        %788 = vmatpush1.bf16.msra.mxu0 0
        %789 = vmatprep.subr.bf16.mxu0 0
        %790 = vmatpush1.bf16.msra.mxu0 0
        %791 = vmatprep.subr.bf16.mxu0 0
        %792 = vmatpush1.bf16.msra.mxu0 0
        %793 = vmatprep.subr.bf16.mxu0 0
        %794 = vmatpush1.bf16.msra.mxu0 0
        %795 = vmatprep.subr.bf16.mxu0 0
        %796 = vmatpush1.bf16.msra.mxu0 0
        %797 = vmatprep.subr.bf16.mxu0 0
        %798 = vmatpush1.bf16.msra.mxu0 0
        %799 = vmatprep.subr.bf16.mxu0 0
        %800 = vmatpush1.bf16.msra.mxu0 0
        %801 = vmatprep.subr.bf16.mxu0 0
        %802 = vmatpush1.bf16.msra.mxu0 0
        %803 = vmatprep.mubr.bf16.mxu0 0
        %804 = vmatmul.mubr.bf16.gmra.mrb[0].mxu0 %v766
        %v805 = vpop.f32.mrb[0].mxu0
        %v806 = vadd.f32 0.0, %v805
        %v807 = vpop.f32.mrb[0].mxu0
        %v808 = vpop.f32.mrb[0].mxu0
        %v809 = vpop.f32.mrb[0].mxu0
        %810 = vdwg.mxu0
        %v811 = vpack.c.bf16 %v806, %v806
        %v812 = vpack.c.bf16 %v373, %v373
        %v814 = vsel %vm387, %v811, 0
        %v817 = vsel %vm451, %v812, 0
        %819 = vmatprep.subr.bf16.mxu0 0
        %820 = vmatpush1.bf16.msra.mxu0 %v817
        %821 = vmatprep.subr.bf16.mxu0 0
        %822 = vmatpush1.bf16.msra.mxu0 0
        %823 = vmatprep.subr.bf16.mxu0 0
        %824 = vmatpush1.bf16.msra.mxu0 0
        %825 = vmatprep.subr.bf16.mxu0 0
        %826 = vmatpush1.bf16.msra.mxu0 0
        %827 = vmatprep.subr.bf16.mxu0 0
        %828 = vmatpush1.bf16.msra.mxu0 0
        %829 = vmatprep.subr.bf16.mxu0 0
        %830 = vmatpush1.bf16.msra.mxu0 0
        %831 = vmatprep.subr.bf16.mxu0 0
        %832 = vmatpush1.bf16.msra.mxu0 0
        %833 = vmatprep.subr.bf16.mxu0 0
        %834 = vmatpush1.bf16.msra.mxu0 0
        %835 = vmatprep.subr.bf16.mxu0 0
        %836 = vmatpush1.bf16.msra.mxu0 0
        %837 = vmatprep.subr.bf16.mxu0 0
        %838 = vmatpush1.bf16.msra.mxu0 0
        %839 = vmatprep.subr.bf16.mxu0 0
        %840 = vmatpush1.bf16.msra.mxu0 0
        %841 = vmatprep.subr.bf16.mxu0 0
        %842 = vmatpush1.bf16.msra.mxu0 0
        %843 = vmatprep.subr.bf16.mxu0 0
        %844 = vmatpush1.bf16.msra.mxu0 0
        %845 = vmatprep.subr.bf16.mxu0 0
        %846 = vmatpush1.bf16.msra.mxu0 0
        %847 = vmatprep.subr.bf16.mxu0 0
        %848 = vmatpush1.bf16.msra.mxu0 0
        %849 = vmatprep.subr.bf16.mxu0 0
        %850 = vmatpush1.bf16.msra.mxu0 0
        %851 = vmatprep.mubr.bf16.mxu0 0
        %852 = vmatmul.mubr.bf16.gmra.mrb[0].mxu0 %v814
        %v853 = vpop.f32.mrb[0].mxu0
        %v854 = vadd.f32 0.0, %v853
        %v855 = vpop.f32.mrb[0].mxu0
        %v856 = vpop.f32.mrb[0].mxu0
        %v857 = vpop.f32.mrb[0].mxu0
        %858 = vdwg.mxu0
        %v859 = vadd.f32 %v696, %v854
        %860 = vrot.lane.b32.xlu0 %v377, 104
        %v861 = vpop.permute.xlu0 %860
        %862 = vrot.lane.b32.xlu0 %v377, 72
        %v863 = vpop.permute.xlu0 %862
        %v865 = vsel %vm387, %v861, 0
        %v868 = vsel %vm387, %v863, 0
        %870 = vmatprep.subr.bf16.mxu0 0
        %871 = vmatpush1.bf16.xpose.msra.mxu0 %v868
        %872 = vmatprep.subr.bf16.mxu0 0
        %873 = vmatpush1.bf16.xpose.msra.mxu0 0
        %874 = vmatprep.subr.bf16.mxu0 0
        %875 = vmatpush1.bf16.xpose.msra.mxu0 0
        %876 = vmatprep.subr.bf16.mxu0 0
        %877 = vmatpush1.bf16.xpose.msra.mxu0 0
        %878 = vmatprep.subr.bf16.mxu0 0
        %879 = vmatpush1.bf16.xpose.msra.mxu0 0
        %880 = vmatprep.subr.bf16.mxu0 0
        %881 = vmatpush1.bf16.xpose.msra.mxu0 0
        %882 = vmatprep.subr.bf16.mxu0 0
        %883 = vmatpush1.bf16.xpose.msra.mxu0 0
        %884 = vmatprep.subr.bf16.mxu0 0
        %885 = vmatpush1.bf16.xpose.msra.mxu0 0
        %886 = vmatprep.subr.bf16.mxu0 0
        %887 = vmatpush1.bf16.xpose.msra.mxu0 0
        %888 = vmatprep.subr.bf16.mxu0 0
        %889 = vmatpush1.bf16.xpose.msra.mxu0 0
        %890 = vmatprep.subr.bf16.mxu0 0
        %891 = vmatpush1.bf16.xpose.msra.mxu0 0
        %892 = vmatprep.subr.bf16.mxu0 0
        %893 = vmatpush1.bf16.xpose.msra.mxu0 0
        %894 = vmatprep.subr.bf16.mxu0 0
        %895 = vmatpush1.bf16.xpose.msra.mxu0 0
        %896 = vmatprep.subr.bf16.mxu0 0
        %897 = vmatpush1.bf16.xpose.msra.mxu0 0
        %898 = vmatprep.subr.bf16.mxu0 0
        %899 = vmatpush1.bf16.xpose.msra.mxu0 0
        %900 = vmatprep.subr.bf16.mxu0 0
        %901 = vmatpush1.bf16.xpose.msra.mxu0 0
        %902 = vmatprep.mubr.bf16.mxu0 0
        %903 = vmatmul.mubr.bf16.gmra.mrb[0].mxu0 %v865
        %v904 = vpop.f32.mrb[0].mxu0
        %v905 = vadd.f32 %v382, %v904
        %v906 = vpop.f32.mrb[0].mxu0
        %v907 = vpop.f32.mrb[0].mxu0
        %v908 = vpop.f32.mrb[0].mxu0
        %909 = vdwg.mxu0
        %v910 = vsel %vm387, %v905, -inf
        %911 = vmax.xlane.f32.xlu0 %v910
        %v912 = vpop.xlane.xlu0 %911
        %v913 = vsub.f32 %v905, %v912
        %v914 = vmul.f32 %v913, 1.442695
        %v915 = vpow.pop %v914
        %v916 = vsel %vm387, %v915, 0.0
        %917 = vadd.xlane.f32.xlu0 %v916
        %v918 = vpop.xlane.xlu0 %917
        %v919 = vrcp.pop %v918
        %v920 = vmul.f32 %v915, %v919
        %v921 = vpack.c.bf16 %v920, %v920
        %922 = vrot.lane.b32.xlu0 %v377, 40
        %v923 = vpop.permute.xlu0 %922
        %v925 = vsel %vm387, %v921, 0
        %v928 = vsel %vm451, %v923, 0
        %930 = vmatprep.subr.bf16.mxu0 0
        %931 = vmatpush1.bf16.msra.mxu0 %v928
        %932 = vmatprep.subr.bf16.mxu0 0
        %933 = vmatpush1.bf16.msra.mxu0 0
        %934 = vmatprep.subr.bf16.mxu0 0
        %935 = vmatpush1.bf16.msra.mxu0 0
        %936 = vmatprep.subr.bf16.mxu0 0
        %937 = vmatpush1.bf16.msra.mxu0 0
        %938 = vmatprep.subr.bf16.mxu0 0
        %939 = vmatpush1.bf16.msra.mxu0 0
        %940 = vmatprep.subr.bf16.mxu0 0
        %941 = vmatpush1.bf16.msra.mxu0 0
        %942 = vmatprep.subr.bf16.mxu0 0
        %943 = vmatpush1.bf16.msra.mxu0 0
        %944 = vmatprep.subr.bf16.mxu0 0
        %945 = vmatpush1.bf16.msra.mxu0 0
        %946 = vmatprep.subr.bf16.mxu0 0
        %947 = vmatpush1.bf16.msra.mxu0 0
        %948 = vmatprep.subr.bf16.mxu0 0
        %949 = vmatpush1.bf16.msra.mxu0 0
        %950 = vmatprep.subr.bf16.mxu0 0
        %951 = vmatpush1.bf16.msra.mxu0 0
        %952 = vmatprep.subr.bf16.mxu0 0
        %953 = vmatpush1.bf16.msra.mxu0 0
        %954 = vmatprep.subr.bf16.mxu0 0
        %955 = vmatpush1.bf16.msra.mxu0 0
        %956 = vmatprep.subr.bf16.mxu0 0
        %957 = vmatpush1.bf16.msra.mxu0 0
        %958 = vmatprep.subr.bf16.mxu0 0
        %959 = vmatpush1.bf16.msra.mxu0 0
        %960 = vmatprep.subr.bf16.mxu0 0
        %961 = vmatpush1.bf16.msra.mxu0 0
        %962 = vmatprep.mubr.bf16.mxu0 0
        %963 = vmatmul.mubr.bf16.gmra.mrb[0].mxu0 %v925
        %v964 = vpop.f32.mrb[0].mxu0
        %v965 = vadd.f32 0.0, %v964
        %v966 = vpop.f32.mrb[0].mxu0
        %v967 = vpop.f32.mrb[0].mxu0
        %v968 = vpop.f32.mrb[0].mxu0
        %969 = vdwg.mxu0
        %v970 = vpack.c.bf16 %v965, %v965
        %v971 = vpack.c.bf16 %v374, %v374
        %v973 = vsel %vm387, %v970, 0
        %v976 = vsel %vm451, %v971, 0
        %978 = vmatprep.subr.bf16.mxu0 0
        %979 = vmatpush1.bf16.msra.mxu0 %v976
        %980 = vmatprep.subr.bf16.mxu0 0
        %981 = vmatpush1.bf16.msra.mxu0 0
        %982 = vmatprep.subr.bf16.mxu0 0
        %983 = vmatpush1.bf16.msra.mxu0 0
        %984 = vmatprep.subr.bf16.mxu0 0
        %985 = vmatpush1.bf16.msra.mxu0 0
        %986 = vmatprep.subr.bf16.mxu0 0
        %987 = vmatpush1.bf16.msra.mxu0 0
        %988 = vmatprep.subr.bf16.mxu0 0
        %989 = vmatpush1.bf16.msra.mxu0 0
        %990 = vmatprep.subr.bf16.mxu0 0
        %991 = vmatpush1.bf16.msra.mxu0 0
        %992 = vmatprep.subr.bf16.mxu0 0
        %993 = vmatpush1.bf16.msra.mxu0 0
        %994 = vmatprep.subr.bf16.mxu0 0
        %995 = vmatpush1.bf16.msra.mxu0 0
        %996 = vmatprep.subr.bf16.mxu0 0
        %997 = vmatpush1.bf16.msra.mxu0 0
        %998 = vmatprep.subr.bf16.mxu0 0
        %999 = vmatpush1.bf16.msra.mxu0 0
        %1000 = vmatprep.subr.bf16.mxu0 0
        %1001 = vmatpush1.bf16.msra.mxu0 0
        %1002 = vmatprep.subr.bf16.mxu0 0
        %1003 = vmatpush1.bf16.msra.mxu0 0
        %1004 = vmatprep.subr.bf16.mxu0 0
        %1005 = vmatpush1.bf16.msra.mxu0 0
        %1006 = vmatprep.subr.bf16.mxu0 0
        %1007 = vmatpush1.bf16.msra.mxu0 0
        %1008 = vmatprep.subr.bf16.mxu0 0
        %1009 = vmatpush1.bf16.msra.mxu0 0
        %1010 = vmatprep.mubr.bf16.mxu0 0
        %1011 = vmatmul.mubr.bf16.gmra.mrb[0].mxu0 %v973
        %v1012 = vpop.f32.mrb[0].mxu0
        %v1013 = vadd.f32 0.0, %v1012
        %v1014 = vpop.f32.mrb[0].mxu0
        %v1015 = vpop.f32.mrb[0].mxu0
        %v1016 = vpop.f32.mrb[0].mxu0
        %1017 = vdwg.mxu0
        %v1018 = vadd.f32 %v859, %v1013
        %v1019 = vld [vmem:[%s5] sm:$0x1]
        %v1021 = vlaneseq
        %v1022 = vshrl.u32 %v1021, 7
        %v1023 = vsub.s32 0, %v1022
        %v1024 = vrot.slane %v1019, %v1023
        %v1026 = vadd.f32 %v1018, %v1024
        %1027 = vst.msk [vmem:[%s306] sm:$0xff] %vm326, %v1026
        %s1028 = sand.u32 %s168, 1
        %s1029 = scalar_lea.sflag [#allocation4], %s1028
        %s1030 = sand.u32 %s168, 1
        %s1031 = smul.addr %s1030, 8
        %s1032 = scalar_lea.vmem [#allocation8], %s1031
        // Predicated region
        $region57: #{tpu_custom_call.1} parent=43 // pred_check
          %p1033 = pneg %p178
        $region58: #{tpu_custom_call.1} parent=43 // pred_check_branch
          %1035 = sbr.rel (%p1033) target = $region60
        $region59: #{tpu_custom_call.1} parent=43 // pred_region
          %s1037 = ssub.s32 128, 128
          %1038 = vsyncadd %s1029, %s1037
          %s1039 = smul.addr %s24, 128
          %s1040 = scalar_lea.hbm %s6, %s1039
          %s1042 = sshll.u32 %s1032, 4
          %s1043 = int_to_ptr.vmem [resolvable:$true] %s1042
          %1045 = dma.vmem_to_hbm [thread:$0]  %s1043, 128, %s1040, %s1029
        $region60: #{tpu_custom_call.1} parent=43 // pred_fallthru
          _
      $region44: #{tpu_custom_call.1} parent=5 // pred_fallthru
        _
      %p1046 = scmp.le.s32.totalorder 2, %s19
      // Predicated region
      $region61: #{tpu_custom_call.1} parent=5 // pred_check
        %p1047 = pneg %p1046
      $region62: #{tpu_custom_call.1} parent=5 // pred_check_branch
        %1049 = sbr.rel (%p1047) target = $region64
      $region63: #{tpu_custom_call.1} parent=5 // pred_region
        %s1050 = ssub.s32 %s19, 2
        // Predicated region
        $region65: #{tpu_custom_call.1} parent=63 // pred_check
          %p1051 = pneg %p184
        $region66: #{tpu_custom_call.1} parent=63 // pred_check_branch
          %1053 = sbr.rel (%p1051) target = $region68
        $region67: #{tpu_custom_call.1} parent=63 // pred_region
          %s1054 = sand.u32 %s169, 1
          %s1055 = scalar_lea.sflag [#allocation4], %s1054
          %s1056 = sand.u32 %s169, 1
          %s1057 = smul.addr %s1056, 8
          %s1058 = scalar_lea.vmem [#allocation8], %s1057
          %1059 = dma.done %s1055, 128
        $region68: #{tpu_custom_call.1} parent=63 // pred_fallthru
          _
      $region64: #{tpu_custom_call.1} parent=5 // pred_fallthru
        _
    $region6: #{tpu_custom_call.1} parent=1 // loop_footer
      %s23 = sadd.s32 1, %s19
    $region7: #{tpu_custom_call.1} parent=1 // loop_footer_branch
      %18 = sbr.rel target = $region3
    $region8: #{tpu_custom_call.1} parent=1 // loop_exit
      _
    %1060 = vsyncpa [#allocation3], 1
    %s1061 = scalar_lea.sflag [#allocation3], 1
    %1062 = vsyncpa %s1061, 1
    %1063 = vsyncpa [#allocation6], 1
    %1064 = vsyncpa [#allocation4], 1
    %s1065 = scalar_lea.sflag [#allocation4], 1
    %1066 = vsyncpa %s1065, 1

</llo_original>
